<compile_context>
chip_gen: v7x
topology: tpu7x:2x2x1
jax: 0.10.0
libtpu: 0.0.40
codegen_flags: <defaults>
</compile_context>

<pallas_src>
import math
import functools

import jax
import jax.numpy as jnp
from jax import lax
from jax.experimental import pallas as pl
from jax.experimental.pallas import tpu as pltpu


def _rel_attn_kernel(x_ref, w_ref, b_ref, maskb_ref, out_ref, proj_ref, *,
                     heads, head_dim, rel_p, rel_window, q_tile, seq_len, model_dim):
    """One (batch, query-tile) grid step.

    x_ref     : (S, D)        f32   input sequence (constant across q tiles)
    w_ref     : (D, Wtot)     bf16  fused projection weight  [q*inv | k | v | rel | pad]
    b_ref     : (1, Wtot)     f32   fused projection bias (same column layout)
    maskb_ref : (1, S)        f32   additive key-mask bias (0 keep / -1e30 drop)
    out_ref   : (TQ, D)       f32   attention output tile (lane-dense slab)
    proj_ref  : (S, Wtot)     f32   VMEM scratch: fused projection of the full sequence
    """
    hd = head_dim
    d = model_dim
    s = seq_len
    tq = q_tile
    pdim = rel_p
    w = rel_window

    qi = pl.program_id(1)

    # Fused projection of the FULL sequence, computed once per batch element
    # (q-tile grid axis is "arbitrary" so later tiles see the scratch).
    @pl.when(qi == 0)
    def _():
        x_bf = x_ref[...].astype(jnp.bfloat16)
        proj_ref[...] = (jnp.dot(x_bf, w_ref[...], preferred_element_type=jnp.float32)
                         + b_ref[...])

    row0 = pl.multiple_of(qi * tq, tq)

    # Key-mask additive bias (broadcasts over query rows of this tile).
    mask_bias = maskb_ref[...]                                   # (1, S) f32

    # Banded relative-position indicators for this query tile; generated once
    # per grid step and reused by every head (no (P,S,S) tensor from HBM).
    rows = lax.broadcasted_iota(jnp.int32, (tq, s), 0) + row0
    cols = lax.broadcasted_iota(jnp.int32, (tq, s), 1)
    off = jnp.clip(cols - rows, -w, w) + w                       # (TQ, S) int32
    inds = [(off == p).astype(jnp.float32) for p in range(pdim)]
    # TODO(synk): keep `inds` + FMA in bf16 on v6e/v7x (bf16 VALU) for 2x throughput.

    for h in range(heads):                       # static unroll; heads is small
        q = proj_ref[pl.ds(row0, tq), pl.ds(h * hd, hd)].astype(jnp.bfloat16)     # (TQ, HD)
        k = proj_ref[:, pl.ds(d + h * hd, hd)].astype(jnp.bfloat16)               # (S, HD)
        v = proj_ref[:, pl.ds(2 * d + h * hd, hd)].astype(jnp.bfloat16)           # (S, HD)
        rel = proj_ref[pl.ds(row0, tq), pl.ds(3 * d + h * pdim, pdim)]            # (TQ, P) f32

        # content scores; 1/sqrt(head_dim) already folded into the q columns
        scores = lax.dot_general(q, k, (((1,), (1,)), ((), ())),
                                 preferred_element_type=jnp.float32)              # (TQ, S)
        scores = scores + mask_bias
        # banded gather of relative logits as P multiply-adds
        for p in range(pdim):
            scores = scores + rel[:, p:p + 1] * inds[p]

        # softmax over keys (f32), reciprocal on the EUP slot
        m = jnp.max(scores, axis=-1, keepdims=True)
        e = jnp.exp(scores - m)
        denom = jnp.sum(e, axis=-1, keepdims=True)
        attn = (e * pl.reciprocal(denom, approx=True)).astype(jnp.bfloat16)       # (TQ, S)

        # per-head direct store into the lane-dense output slab
        out_ref[:, pl.ds(h * hd, hd)] = jnp.dot(
            attn, v, preferred_element_type=jnp.float32).astype(out_ref.dtype)


def relative_self_attention(x, mask, w_qkv, b_qkv, w_rel, b_rel, *,
                            heads, rel_window, q_tile=None):
    """Pallas wrapper reproducing RelativeSelfAttention.forward.

    x      : (B, S, D) float32
    mask   : (B, S) bool (True = keep key position)
    w_qkv  : (3D, D)   PyTorch Linear weight layout (out, in)
    b_qkv  : (3D,)
    w_rel  : (P, HD)   rel_proj weight (out, in), P = 2*rel_window + 1
    b_rel  : (P,)
    returns (B, S, D) float32
    """
    b, s, d = x.shape
    assert d % heads == 0
    hd = d // heads
    pdim = 2 * rel_window + 1
    assert w_rel.shape == (pdim, hd)
    inv_norm = 1.0 / math.sqrt(d / heads)

    # --- query-tile selection -------------------------------------------------
    if q_tile is None:
        q_tile = s
        if s > 256:
            for cand in (256, 128, 64, 32, 16, 8):
                if s % cand == 0:
                    q_tile = cand
                    break
    tq = q_tile
    assert s % tq == 0
    nq = s // tq

    # --- parameter re-layout (glue, plain JAX, runs once) ---------------------
    # PyTorch output channel o = h*3*hd + c*hd + j  (c = 0:q, 1:k, 2:v), because
    # the module reshapes qkv to (B,S,H,3*hd) and then chunks q,k,v.
    w_r = w_qkv.reshape(heads, 3, hd, d)                      # [h, c, j, in]
    b_r = b_qkv.reshape(heads, 3, hd)                         # [h, c, j]
    wq, wk, wv = w_r[:, 0], w_r[:, 1], w_r[:, 2]              # (H, HD, D)
    bq, bk, bv = b_r[:, 0], b_r[:, 1], b_r[:, 2]              # (H, HD)

    # fused projection columns: [ q*inv_norm (h-major) | k | v | rel (h-major) | pad ]
    wq_cols = jnp.transpose(wq, (2, 0, 1)).reshape(d, d) * inv_norm   # (D, D)
    wk_cols = jnp.transpose(wk, (2, 0, 1)).reshape(d, d)
    wv_cols = jnp.transpose(wv, (2, 0, 1)).reshape(d, d)
    # rel_logits_h = raw_q_h @ w_rel^T + b_rel  ->  fold rel_proj into the projection:
    wrel_cols = jnp.einsum('hjd,pj->dhp', wq, w_rel).reshape(d, heads * pdim)
    brel_cols = (jnp.einsum('hj,pj->hp', bq, w_rel) + b_rel[None, :]).reshape(heads * pdim)

    total_cols = 3 * d + heads * pdim
    wtot = int(pl.cdiv(total_cols, 128)) * 128                # lane-dense projection width
    pad = wtot - total_cols

    w_fused = jnp.concatenate(
        [wq_cols, wk_cols, wv_cols, wrel_cols, jnp.zeros((d, pad), jnp.float32)],
        axis=1).astype(jnp.bfloat16)                          # (D, Wtot) bf16
    b_fused = jnp.concatenate(
        [(bq * inv_norm).reshape(d), bk.reshape(d), bv.reshape(d),
         brel_cols, jnp.zeros((pad,), jnp.float32)]).reshape(1, wtot)  # (1, Wtot) f32

    # key mask as an additive bias (select -> add)
    mask_bias = jnp.where(mask, 0.0, -1e30).astype(jnp.float32)[:, None, :]  # (B, 1, S)

    kernel = functools.partial(_rel_attn_kernel, heads=heads, head_dim=hd,
                               rel_p=pdim, rel_window=rel_window, q_tile=tq,
                               seq_len=s, model_dim=d)

    # --- cost estimate (advisory) ---------------------------------------------
    flops = int(b * (2 * s * d * wtot
                     + heads * (2 * s * s * hd      # q @ k^T
                                + 2 * s * s * hd    # attn @ v
                                + 2 * pdim * s * s)))  # band FMA
    transcendentals = int(b * heads * s * s)
    bytes_accessed = int(4 * b * s * d + 2 * d * wtot + 4 * wtot
                         + 4 * b * s + 4 * b * s * d)

    # --- explicit VMEM budget (capped for v7x's 64 MiB physical VMEM) ----------
    est = (2 * s * d * 4              # x block (double buffered)
           + 2 * d * wtot * 2         # fused weight (bf16, double buffered)
           + 2 * wtot * 4             # fused bias
           + 2 * s * 4                # mask bias
           + 2 * tq * d * 4           # output tile
           + s * wtot * 4             # projection scratch
           + (pdim + 8) * tq * s * 4) # in-flight indicators + per-head temps
    vmem_limit = int(min(56 * 1024 * 1024, max(32 * 1024 * 1024, int(est * 1.5))))

    out = pl.pallas_call(
        kernel,
        out_shape=jax.ShapeDtypeStruct((b, s, d), jnp.float32),
        grid_spec=pltpu.PrefetchScalarGridSpec(
            num_scalar_prefetch=0,
            grid=(b, nq),
            in_specs=[
                pl.BlockSpec((None, s, d), lambda bi, qi: (bi, 0, 0)),     # x (const across qi)
                pl.BlockSpec((d, wtot), lambda bi, qi: (0, 0)),            # fused weight (bf16)
                pl.BlockSpec((1, wtot), lambda bi, qi: (0, 0)),            # fused bias
                pl.BlockSpec((None, 1, s), lambda bi, qi: (bi, 0, 0)),     # mask bias
            ],
            out_specs=pl.BlockSpec((None, tq, d), lambda bi, qi: (bi, qi, 0)),
            scratch_shapes=[pltpu.VMEM((s, wtot), jnp.float32)],           # fused projection
        ),
        compiler_params=pltpu.CompilerParams(
            dimension_semantics=("parallel", "arbitrary"),
            vmem_limit_bytes=vmem_limit),
        cost_estimate=pl.CostEstimate(flops=flops, transcendentals=transcendentals,
                                      bytes_accessed=bytes_accessed),
    )(x, w_fused, b_fused, mask_bias)

    return out


def _reference(x, mask, w_qkv, b_qkv, w_rel, b_rel, *, heads, rel_window):
    """Pure-JAX f32 reference mirroring the PyTorch forward (for validation)."""
    b, s, d = x.shape
    hd = d // heads
    qkv = x @ w_qkv.T + b_qkv
    qkv = qkv.reshape(b, s, heads, 3 * hd)
    q, k, v = jnp.split(qkv, 3, axis=-1)
    q, k, v = (t.transpose(0, 2, 1, 3) for t in (q, k, v))       # (B, H, S, HD)
    off = jnp.clip(jnp.arange(s)[None, :] - jnp.arange(s)[:, None],
                   -rel_window, rel_window) + rel_window         # (S, S)
    content = jnp.einsum('bhik,bhjk->bhij', q, k) / math.sqrt(d / heads)
    rel = q @ w_rel.T + b_rel                                    # (B, H, S, P)
    pos = jnp.take_along_axis(rel, jnp.broadcast_to(off, (b, heads, s, s)), axis=-1)
    scores = content + pos
    scores = jnp.where(mask[:, None, None, :], scores, -jnp.inf)
    attn = jax.nn.softmax(scores, axis=-1)
    out = jnp.einsum('bhij,bhjk->bhik', attn, v)
    return out.transpose(0, 2, 1, 3).reshape(b, s, d)


if __name__ == "__main__":
    # Small shapes: batch=2, seq=8, dim=32, heads=4 (head_dim=8), rel_window=4 (P=9)
    B, S, D, H, W = 2, 8, 32, 4, 4
    P = 2 * W + 1

    key = jax.random.PRNGKey(0)
    kx, kw, kb, kwr, kbr = jax.random.split(key, 5)

    x = jax.random.normal(kx, (B, S, D), dtype=jnp.float32)
    # mask: last two key positions of batch 1 are padded out
    mask = jnp.stack([jnp.ones((S,), bool),
                      jnp.arange(S) < (S - 2)], axis=0)

    w_qkv = jax.random.normal(kw, (3 * D, D), dtype=jnp.float32) * 0.1
    b_qkv = jax.random.normal(kb, (3 * D,), dtype=jnp.float32) * 0.1
    w_rel = jax.random.normal(kwr, (P, D // H), dtype=jnp.float32) * 0.1
    b_rel = jax.random.normal(kbr, (P,), dtype=jnp.float32) * 0.1

    out = relative_self_attention(x, mask, w_qkv, b_qkv, w_rel, b_rel,
                                  heads=H, rel_window=W)
    out = jax.block_until_ready(out)

    ref = _reference(x, mask, w_qkv, b_qkv, w_rel, b_rel, heads=H, rel_window=W)
    assert out.shape == (B, S, D)
    # bf16 matmul operands + approx reciprocal -> relaxed tolerance vs f32 reference
    assert jnp.allclose(out, ref, atol=5e-2, rtol=5e-2), "mismatch vs reference"

    print("KERNEL_OK")
</pallas_src>

<mosaic_0001>
module attributes {stable_mosaic.version = 11 : i64} {
  func.func @_rel_attn_kernel(%arg0: i32, %arg1: i32, %arg2: memref<1x8x32xf32, #tpu.memory_space<vmem>>, %arg3: memref<32x256xbf16, #tpu.memory_space<vmem>>, %arg4: memref<1x256xf32, #tpu.memory_space<vmem>>, %arg5: memref<1x1x8xf32, #tpu.memory_space<vmem>>, %arg6: memref<1x8x32xf32, #tpu.memory_space<vmem>>, %arg7: memref<8x256xf32, #tpu.memory_space<vmem>>) attributes {dimension_semantics = [#tpu.dimension_semantics<parallel>, #tpu.dimension_semantics<arbitrary>], iteration_bounds = array<i64: 2, 1>, scalar_prefetch = 0 : i64, scratch_operands = 1 : i64, tpu.core_type = #tpu.core_type<tc>, window_params = [{transform_indices = @transform_0, window_bounds = array<i64: 1, 8, 32>}, {pipeline_mode = #tpu.pipeline_mode<synchronous>, transform_indices = @transform_1, window_bounds = array<i64: 32, 256>}, {pipeline_mode = #tpu.pipeline_mode<synchronous>, transform_indices = @transform_2, window_bounds = array<i64: 1, 256>}, {transform_indices = @transform_3, window_bounds = array<i64: 1, 1, 8>}, {transform_indices = @transform_4, window_bounds = array<i64: 1, 8, 32>}]} {
    %c0_i32 = arith.constant 0 : i32
    %0 = arith.cmpi eq, %arg1, %c0_i32 : i32
    %1 = arith.extui %0 : i1 to i32
    %c0_i32_0 = arith.constant 0 : i32
    %2 = arith.cmpi ne, %1, %c0_i32_0 : i32
    scf.if %2 {
      %c0_43 = arith.constant 0 : index
      %c0_44 = arith.constant 0 : index
      %c0_45 = arith.constant 0 : index
      %306 = vector.load %arg2[%c0_43, %c0_44, %c0_45] : memref<1x8x32xf32, #tpu.memory_space<vmem>>, vector<1x8x32xf32>
      %307 = vector.shape_cast %306 : vector<1x8x32xf32> to vector<8x32xf32>
      %308 = arith.truncf %307 : vector<8x32xf32> to vector<8x32xbf16>
      %c0_46 = arith.constant 0 : index
      %c0_47 = arith.constant 0 : index
      %309 = vector.load %arg3[%c0_46, %c0_47] : memref<32x256xbf16, #tpu.memory_space<vmem>>, vector<32x256xbf16>
      %cst_48 = arith.constant dense<0.000000e+00> : vector<8x256xf32>
      %310 = tpu.matmul %308, %309, %cst_48 {dimension_numbers = #tpu.dot_dimension_numbers<[1], [0], [0], [1], [0, 0, 1, 1], [], []>} : vector<8x32xbf16>, vector<32x256xbf16>, vector<8x256xf32> -> vector<8x256xf32>
      %c0_49 = arith.constant 0 : index
      %c0_50 = arith.constant 0 : index
      %311 = vector.load %arg4[%c0_49, %c0_50] : memref<1x256xf32, #tpu.memory_space<vmem>>, vector<1x256xf32>
      %312 = vector.broadcast %311 : vector<1x256xf32> to vector<8x256xf32>
      %313 = arith.addf %310, %312 : vector<8x256xf32>
      %c0_51 = arith.constant 0 : index
      %c0_52 = arith.constant 0 : index
      %314 = vector.load %arg7[%c0_51, %c0_52] : memref<8x256xf32, #tpu.memory_space<vmem>>, vector<8x256xf32>
      tpu.vector_store %arg7[%c0_51, %c0_52], %313 {strides = array<i32>} : memref<8x256xf32, #tpu.memory_space<vmem>>, vector<8x256xf32>,
    } else {
    }
    %c8_i32 = arith.constant 8 : i32
    %3 = arith.muli %arg1, %c8_i32 : i32
    %4 = tpu.assume_multiple %3, 8 : i32
    %c0 = arith.constant 0 : index
    %c0_1 = arith.constant 0 : index
    %c0_2 = arith.constant 0 : index
    %5 = vector.load %arg5[%c0, %c0_1, %c0_2] : memref<1x1x8xf32, #tpu.memory_space<vmem>>, vector<1x1x8xf32>
    %6 = vector.shape_cast %5 : vector<1x1x8xf32> to vector<1x8xf32>
    %7 = tpu.iota {dimensions = array<i32: 0>} : vector<8x8xi32>
    %8 = vector.broadcast %4 : i32 to vector<8x8xi32>
    %9 = arith.addi %7, %8 : vector<8x8xi32>
    %10 = tpu.iota {dimensions = array<i32: 1>} : vector<8x8xi32>
    %11 = arith.subi %10, %9 : vector<8x8xi32>
    %c-4_i32 = arith.constant -4 : i32
    %c4_i32 = arith.constant 4 : i32
    %12 = vector.broadcast %c-4_i32 : i32 to vector<8x8xi32>
    %13 = arith.maxsi %12, %11 : vector<8x8xi32>
    %14 = vector.broadcast %c4_i32 : i32 to vector<8x8xi32>
    %15 = arith.minsi %14, %13 : vector<8x8xi32>
    %c4_i32_3 = arith.constant 4 : i32
    %16 = vector.broadcast %c4_i32_3 : i32 to vector<8x8xi32>
    %17 = arith.addi %15, %16 : vector<8x8xi32>
    %c0_i32_4 = arith.constant 0 : i32
    %18 = vector.broadcast %c0_i32_4 : i32 to vector<8x8xi32>
    %19 = arith.cmpi eq, %17, %18 : vector<8x8xi32>
    %20 = arith.extui %19 : vector<8x8xi1> to vector<8x8xi32>
    %21 = arith.sitofp %20 : vector<8x8xi32> to vector<8x8xf32>
    %c1_i32 = arith.constant 1 : i32
    %22 = vector.broadcast %c1_i32 : i32 to vector<8x8xi32>
    %23 = arith.cmpi eq, %17, %22 : vector<8x8xi32>
    %24 = arith.extui %23 : vector<8x8xi1> to vector<8x8xi32>
    %25 = arith.sitofp %24 : vector<8x8xi32> to vector<8x8xf32>
    %c2_i32 = arith.constant 2 : i32
    %26 = vector.broadcast %c2_i32 : i32 to vector<8x8xi32>
    %27 = arith.cmpi eq, %17, %26 : vector<8x8xi32>
    %28 = arith.extui %27 : vector<8x8xi1> to vector<8x8xi32>
    %29 = arith.sitofp %28 : vector<8x8xi32> to vector<8x8xf32>
    %c3_i32 = arith.constant 3 : i32
    %30 = vector.broadcast %c3_i32 : i32 to vector<8x8xi32>
    %31 = arith.cmpi eq, %17, %30 : vector<8x8xi32>
    %32 = arith.extui %31 : vector<8x8xi1> to vector<8x8xi32>
    %33 = arith.sitofp %32 : vector<8x8xi32> to vector<8x8xf32>
    %c4_i32_5 = arith.constant 4 : i32
    %34 = vector.broadcast %c4_i32_5 : i32 to vector<8x8xi32>
    %35 = arith.cmpi eq, %17, %34 : vector<8x8xi32>
    %36 = arith.extui %35 : vector<8x8xi1> to vector<8x8xi32>
    %37 = arith.sitofp %36 : vector<8x8xi32> to vector<8x8xf32>
    %c5_i32 = arith.constant 5 : i32
    %38 = vector.broadcast %c5_i32 : i32 to vector<8x8xi32>
    %39 = arith.cmpi eq, %17, %38 : vector<8x8xi32>
    %40 = arith.extui %39 : vector<8x8xi1> to vector<8x8xi32>
    %41 = arith.sitofp %40 : vector<8x8xi32> to vector<8x8xf32>
    %c6_i32 = arith.constant 6 : i32
    %42 = vector.broadcast %c6_i32 : i32 to vector<8x8xi32>
    %43 = arith.cmpi eq, %17, %42 : vector<8x8xi32>
    %44 = arith.extui %43 : vector<8x8xi1> to vector<8x8xi32>
    %45 = arith.sitofp %44 : vector<8x8xi32> to vector<8x8xf32>
    %c7_i32 = arith.constant 7 : i32
    %46 = vector.broadcast %c7_i32 : i32 to vector<8x8xi32>
    %47 = arith.cmpi eq, %17, %46 : vector<8x8xi32>
    %48 = arith.extui %47 : vector<8x8xi1> to vector<8x8xi32>
    %49 = arith.sitofp %48 : vector<8x8xi32> to vector<8x8xf32>
    %c8_i32_6 = arith.constant 8 : i32
    %50 = vector.broadcast %c8_i32_6 : i32 to vector<8x8xi32>
    %51 = arith.cmpi eq, %17, %50 : vector<8x8xi32>
    %52 = arith.extui %51 : vector<8x8xi1> to vector<8x8xi32>
    %53 = arith.sitofp %52 : vector<8x8xi32> to vector<8x8xf32>
    %54 = arith.index_cast %4 : i32 to index
    %c0_7 = arith.constant 0 : index
    %55 = vector.load %arg7[%54, %c0_7] : memref<8x256xf32, #tpu.memory_space<vmem>>, vector<8x8xf32>
    %56 = arith.truncf %55 : vector<8x8xf32> to vector<8x8xbf16>
    %c0_8 = arith.constant 0 : index
    %c32 = arith.constant 32 : index
    %57 = vector.load %arg7[%c0_8, %c32] : memref<8x256xf32, #tpu.memory_space<vmem>>, vector<8x8xf32>
    %58 = arith.truncf %57 : vector<8x8xf32> to vector<8x8xbf16>
    %c0_9 = arith.constant 0 : index
    %c64 = arith.constant 64 : index
    %59 = vector.load %arg7[%c0_9, %c64] : memref<8x256xf32, #tpu.memory_space<vmem>>, vector<8x8xf32>
    %60 = arith.truncf %59 : vector<8x8xf32> to vector<8x8xbf16>
    %61 = arith.index_cast %4 : i32 to index
    %c96 = arith.constant 96 : index
    %62 = vector.load %arg7[%61, %c96] : memref<8x256xf32, #tpu.memory_space<vmem>>, vector<8x9xf32>
    %cst = arith.constant dense<0.000000e+00> : vector<8x8xf32>
    %63 = tpu.matmul %56, %58, %cst {dimension_numbers = #tpu.dot_dimension_numbers<[1], [1], [0], [0], [0, 0, 1, 0], [], []>} : vector<8x8xbf16>, vector<8x8xbf16>, vector<8x8xf32> -> vector<8x8xf32>
    %64 = vector.broadcast %6 : vector<1x8xf32> to vector<8x8xf32>
    %65 = arith.addf %63, %64 : vector<8x8xf32>
    %66 = vector.extract_strided_slice %62 {offsets = [0, 0], sizes = [8, 1], strides = [1, 1]} : vector<8x9xf32> to vector<8x1xf32>
    %67 = vector.broadcast %66 : vector<8x1xf32> to vector<8x8xf32>
    %68 = arith.mulf %67, %21 : vector<8x8xf32>
    %69 = arith.addf %65, %68 : vector<8x8xf32>
    %70 = vector.extract_strided_slice %62 {offsets = [0, 1], sizes = [8, 1], strides = [1, 1]} : vector<8x9xf32> to vector<8x1xf32>
    %71 = vector.broadcast %70 : vector<8x1xf32> to vector<8x8xf32>
    %72 = arith.mulf %71, %25 : vector<8x8xf32>
    %73 = arith.addf %69, %72 : vector<8x8xf32>
    %74 = vector.extract_strided_slice %62 {offsets = [0, 2], sizes = [8, 1], strides = [1, 1]} : vector<8x9xf32> to vector<8x1xf32>
    %75 = vector.broadcast %74 : vector<8x1xf32> to vector<8x8xf32>
    %76 = arith.mulf %75, %29 : vector<8x8xf32>
    %77 = arith.addf %73, %76 : vector<8x8xf32>
    %78 = vector.extract_strided_slice %62 {offsets = [0, 3], sizes = [8, 1], strides = [1, 1]} : vector<8x9xf32> to vector<8x1xf32>
    %79 = vector.broadcast %78 : vector<8x1xf32> to vector<8x8xf32>
    %80 = arith.mulf %79, %33 : vector<8x8xf32>
    %81 = arith.addf %77, %80 : vector<8x8xf32>
    %82 = vector.extract_strided_slice %62 {offsets = [0, 4], sizes = [8, 1], strides = [1, 1]} : vector<8x9xf32> to vector<8x1xf32>
    %83 = vector.broadcast %82 : vector<8x1xf32> to vector<8x8xf32>
    %84 = arith.mulf %83, %37 : vector<8x8xf32>
    %85 = arith.addf %81, %84 : vector<8x8xf32>
    %86 = vector.extract_strided_slice %62 {offsets = [0, 5], sizes = [8, 1], strides = [1, 1]} : vector<8x9xf32> to vector<8x1xf32>
    %87 = vector.broadcast %86 : vector<8x1xf32> to vector<8x8xf32>
    %88 = arith.mulf %87, %41 : vector<8x8xf32>
    %89 = arith.addf %85, %88 : vector<8x8xf32>
    %90 = vector.extract_strided_slice %62 {offsets = [0, 6], sizes = [8, 1], strides = [1, 1]} : vector<8x9xf32> to vector<8x1xf32>
    %91 = vector.broadcast %90 : vector<8x1xf32> to vector<8x8xf32>
    %92 = arith.mulf %91, %45 : vector<8x8xf32>
    %93 = arith.addf %89, %92 : vector<8x8xf32>
    %94 = vector.extract_strided_slice %62 {offsets = [0, 7], sizes = [8, 1], strides = [1, 1]} : vector<8x9xf32> to vector<8x1xf32>
    %95 = vector.broadcast %94 : vector<8x1xf32> to vector<8x8xf32>
    %96 = arith.mulf %95, %49 : vector<8x8xf32>
    %97 = arith.addf %93, %96 : vector<8x8xf32>
    %98 = vector.extract_strided_slice %62 {offsets = [0, 8], sizes = [8, 1], strides = [1, 1]} : vector<8x9xf32> to vector<8x1xf32>
    %99 = vector.broadcast %98 : vector<8x1xf32> to vector<8x8xf32>
    %100 = arith.mulf %99, %53 : vector<8x8xf32>
    %101 = arith.addf %97, %100 : vector<8x8xf32>
    %cst_10 = arith.constant dense<0xFF800000> : vector<8xf32>
    %102 = vector.multi_reduction <maximumf>, %101, %cst_10 [1] : vector<8x8xf32> to vector<8xf32>
    %103 = vector.shape_cast %102 : vector<8xf32> to vector<8x1xf32>
    %104 = vector.broadcast %103 : vector<8x1xf32> to vector<8x8xf32>
    %105 = arith.subf %101, %104 : vector<8x8xf32>
    %106 = math.exp %105 : vector<8x8xf32>
    %cst_11 = arith.constant dense<0.000000e+00> : vector<8xf32>
    %107 = vector.multi_reduction <add>, %106, %cst_11 [1] : vector<8x8xf32> to vector<8xf32>
    %108 = vector.shape_cast %107 : vector<8xf32> to vector<8x1xf32>
    %109 = tpu.reciprocal %108 {approx = true} : vector<8x1xf32> -> vector<8x1xf32>
    %110 = vector.broadcast %109 : vector<8x1xf32> to vector<8x8xf32>
    %111 = arith.mulf %106, %110 : vector<8x8xf32>
    %112 = arith.truncf %111 : vector<8x8xf32> to vector<8x8xbf16>
    %cst_12 = arith.constant dense<0.000000e+00> : vector<8x8xf32>
    %113 = tpu.matmul %112, %60, %cst_12 {dimension_numbers = #tpu.dot_dimension_numbers<[1], [0], [0], [1], [0, 0, 1, 1], [], []>} : vector<8x8xbf16>, vector<8x8xbf16>, vector<8x8xf32> -> vector<8x8xf32>
    %c0_13 = arith.constant 0 : index
    %c0_14 = arith.constant 0 : index
    %c0_15 = arith.constant 0 : index
    %114 = vector.load %arg6[%c0_13, %c0_14, %c0_15] : memref<1x8x32xf32, #tpu.memory_space<vmem>>, vector<1x8x8xf32>
    %115 = vector.shape_cast %114 : vector<1x8x8xf32> to vector<8x8xf32>
    %116 = vector.shape_cast %113 : vector<8x8xf32> to vector<1x8x8xf32>
    tpu.vector_store %arg6[%c0_13, %c0_14, %c0_15], %116 {strides = array<i32>} : memref<1x8x32xf32, #tpu.memory_space<vmem>>, vector<1x8x8xf32>,
    %117 = arith.index_cast %4 : i32 to index
    %c8 = arith.constant 8 : index
    %118 = vector.load %arg7[%117, %c8] : memref<8x256xf32, #tpu.memory_space<vmem>>, vector<8x8xf32>
    %119 = arith.truncf %118 : vector<8x8xf32> to vector<8x8xbf16>
    %c0_16 = arith.constant 0 : index
    %c40 = arith.constant 40 : index
    %120 = vector.load %arg7[%c0_16, %c40] : memref<8x256xf32, #tpu.memory_space<vmem>>, vector<8x8xf32>
    %121 = arith.truncf %120 : vector<8x8xf32> to vector<8x8xbf16>
    %c0_17 = arith.constant 0 : index
    %c72 = arith.constant 72 : index
    %122 = vector.load %arg7[%c0_17, %c72] : memref<8x256xf32, #tpu.memory_space<vmem>>, vector<8x8xf32>
    %123 = arith.truncf %122 : vector<8x8xf32> to vector<8x8xbf16>
    %124 = arith.index_cast %4 : i32 to index
    %c105 = arith.constant 105 : index
    %125 = vector.load %arg7[%124, %c105] : memref<8x256xf32, #tpu.memory_space<vmem>>, vector<8x9xf32>
    %cst_18 = arith.constant dense<0.000000e+00> : vector<8x8xf32>
    %126 = tpu.matmul %119, %121, %cst_18 {dimension_numbers = #tpu.dot_dimension_numbers<[1], [1], [0], [0], [0, 0, 1, 0], [], []>} : vector<8x8xbf16>, vector<8x8xbf16>, vector<8x8xf32> -> vector<8x8xf32>
    %127 = vector.broadcast %6 : vector<1x8xf32> to vector<8x8xf32>
    %128 = arith.addf %126, %127 : vector<8x8xf32>
    %129 = vector.extract_strided_slice %125 {offsets = [0, 0], sizes = [8, 1], strides = [1, 1]} : vector<8x9xf32> to vector<8x1xf32>
    %130 = vector.broadcast %129 : vector<8x1xf32> to vector<8x8xf32>
    %131 = arith.mulf %130, %21 : vector<8x8xf32>
    %132 = arith.addf %128, %131 : vector<8x8xf32>
    %133 = vector.extract_strided_slice %125 {offsets = [0, 1], sizes = [8, 1], strides = [1, 1]} : vector<8x9xf32> to vector<8x1xf32>
    %134 = vector.broadcast %133 : vector<8x1xf32> to vector<8x8xf32>
    %135 = arith.mulf %134, %25 : vector<8x8xf32>
    %136 = arith.addf %132, %135 : vector<8x8xf32>
    %137 = vector.extract_strided_slice %125 {offsets = [0, 2], sizes = [8, 1], strides = [1, 1]} : vector<8x9xf32> to vector<8x1xf32>
    %138 = vector.broadcast %137 : vector<8x1xf32> to vector<8x8xf32>
    %139 = arith.mulf %138, %29 : vector<8x8xf32>
    %140 = arith.addf %136, %139 : vector<8x8xf32>
    %141 = vector.extract_strided_slice %125 {offsets = [0, 3], sizes = [8, 1], strides = [1, 1]} : vector<8x9xf32> to vector<8x1xf32>
    %142 = vector.broadcast %141 : vector<8x1xf32> to vector<8x8xf32>
    %143 = arith.mulf %142, %33 : vector<8x8xf32>
    %144 = arith.addf %140, %143 : vector<8x8xf32>
    %145 = vector.extract_strided_slice %125 {offsets = [0, 4], sizes = [8, 1], strides = [1, 1]} : vector<8x9xf32> to vector<8x1xf32>
    %146 = vector.broadcast %145 : vector<8x1xf32> to vector<8x8xf32>
    %147 = arith.mulf %146, %37 : vector<8x8xf32>
    %148 = arith.addf %144, %147 : vector<8x8xf32>
    %149 = vector.extract_strided_slice %125 {offsets = [0, 5], sizes = [8, 1], strides = [1, 1]} : vector<8x9xf32> to vector<8x1xf32>
    %150 = vector.broadcast %149 : vector<8x1xf32> to vector<8x8xf32>
    %151 = arith.mulf %150, %41 : vector<8x8xf32>
    %152 = arith.addf %148, %151 : vector<8x8xf32>
    %153 = vector.extract_strided_slice %125 {offsets = [0, 6], sizes = [8, 1], strides = [1, 1]} : vector<8x9xf32> to vector<8x1xf32>
    %154 = vector.broadcast %153 : vector<8x1xf32> to vector<8x8xf32>
    %155 = arith.mulf %154, %45 : vector<8x8xf32>
    %156 = arith.addf %152, %155 : vector<8x8xf32>
    %157 = vector.extract_strided_slice %125 {offsets = [0, 7], sizes = [8, 1], strides = [1, 1]} : vector<8x9xf32> to vector<8x1xf32>
    %158 = vector.broadcast %157 : vector<8x1xf32> to vector<8x8xf32>
    %159 = arith.mulf %158, %49 : vector<8x8xf32>
    %160 = arith.addf %156, %159 : vector<8x8xf32>
    %161 = vector.extract_strided_slice %125 {offsets = [0, 8], sizes = [8, 1], strides = [1, 1]} : vector<8x9xf32> to vector<8x1xf32>
    %162 = vector.broadcast %161 : vector<8x1xf32> to vector<8x8xf32>
    %163 = arith.mulf %162, %53 : vector<8x8xf32>
    %164 = arith.addf %160, %163 : vector<8x8xf32>
    %cst_19 = arith.constant dense<0xFF800000> : vector<8xf32>
    %165 = vector.multi_reduction <maximumf>, %164, %cst_19 [1] : vector<8x8xf32> to vector<8xf32>
    %166 = vector.shape_cast %165 : vector<8xf32> to vector<8x1xf32>
    %167 = vector.broadcast %166 : vector<8x1xf32> to vector<8x8xf32>
    %168 = arith.subf %164, %167 : vector<8x8xf32>
    %169 = math.exp %168 : vector<8x8xf32>
    %cst_20 = arith.constant dense<0.000000e+00> : vector<8xf32>
    %170 = vector.multi_reduction <add>, %169, %cst_20 [1] : vector<8x8xf32> to vector<8xf32>
    %171 = vector.shape_cast %170 : vector<8xf32> to vector<8x1xf32>
    %172 = tpu.reciprocal %171 {approx = true} : vector<8x1xf32> -> vector<8x1xf32>
    %173 = vector.broadcast %172 : vector<8x1xf32> to vector<8x8xf32>
    %174 = arith.mulf %169, %173 : vector<8x8xf32>
    %175 = arith.truncf %174 : vector<8x8xf32> to vector<8x8xbf16>
    %cst_21 = arith.constant dense<0.000000e+00> : vector<8x8xf32>
    %176 = tpu.matmul %175, %123, %cst_21 {dimension_numbers = #tpu.dot_dimension_numbers<[1], [0], [0], [1], [0, 0, 1, 1], [], []>} : vector<8x8xbf16>, vector<8x8xbf16>, vector<8x8xf32> -> vector<8x8xf32>
    %c0_22 = arith.constant 0 : index
    %c0_23 = arith.constant 0 : index
    %c8_24 = arith.constant 8 : index
    %177 = vector.load %arg6[%c0_22, %c0_23, %c8_24] : memref<1x8x32xf32, #tpu.memory_space<vmem>>, vector<1x8x8xf32>
    %178 = vector.shape_cast %177 : vector<1x8x8xf32> to vector<8x8xf32>
    %179 = vector.shape_cast %176 : vector<8x8xf32> to vector<1x8x8xf32>
    tpu.vector_store %arg6[%c0_22, %c0_23, %c8_24], %179 {strides = array<i32>} : memref<1x8x32xf32, #tpu.memory_space<vmem>>, vector<1x8x8xf32>,
    %180 = arith.index_cast %4 : i32 to index
    %c16 = arith.constant 16 : index
    %181 = vector.load %arg7[%180, %c16] : memref<8x256xf32, #tpu.memory_space<vmem>>, vector<8x8xf32>
    %182 = arith.truncf %181 : vector<8x8xf32> to vector<8x8xbf16>
    %c0_25 = arith.constant 0 : index
    %c48 = arith.constant 48 : index
    %183 = vector.load %arg7[%c0_25, %c48] : memref<8x256xf32, #tpu.memory_space<vmem>>, vector<8x8xf32>
    %184 = arith.truncf %183 : vector<8x8xf32> to vector<8x8xbf16>
    %c0_26 = arith.constant 0 : index
    %c80 = arith.constant 80 : index
    %185 = vector.load %arg7[%c0_26, %c80] : memref<8x256xf32, #tpu.memory_space<vmem>>, vector<8x8xf32>
    %186 = arith.truncf %185 : vector<8x8xf32> to vector<8x8xbf16>
    %187 = arith.index_cast %4 : i32 to index
    %c114 = arith.constant 114 : index
    %188 = vector.load %arg7[%187, %c114] : memref<8x256xf32, #tpu.memory_space<vmem>>, vector<8x9xf32>
    %cst_27 = arith.constant dense<0.000000e+00> : vector<8x8xf32>
    %189 = tpu.matmul %182, %184, %cst_27 {dimension_numbers = #tpu.dot_dimension_numbers<[1], [1], [0], [0], [0, 0, 1, 0], [], []>} : vector<8x8xbf16>, vector<8x8xbf16>, vector<8x8xf32> -> vector<8x8xf32>
    %190 = vector.broadcast %6 : vector<1x8xf32> to vector<8x8xf32>
    %191 = arith.addf %189, %190 : vector<8x8xf32>
    %192 = vector.extract_strided_slice %188 {offsets = [0, 0], sizes = [8, 1], strides = [1, 1]} : vector<8x9xf32> to vector<8x1xf32>
    %193 = vector.broadcast %192 : vector<8x1xf32> to vector<8x8xf32>
    %194 = arith.mulf %193, %21 : vector<8x8xf32>
    %195 = arith.addf %191, %194 : vector<8x8xf32>
    %196 = vector.extract_strided_slice %188 {offsets = [0, 1], sizes = [8, 1], strides = [1, 1]} : vector<8x9xf32> to vector<8x1xf32>
    %197 = vector.broadcast %196 : vector<8x1xf32> to vector<8x8xf32>
    %198 = arith.mulf %197, %25 : vector<8x8xf32>
    %199 = arith.addf %195, %198 : vector<8x8xf32>
    %200 = vector.extract_strided_slice %188 {offsets = [0, 2], sizes = [8, 1], strides = [1, 1]} : vector<8x9xf32> to vector<8x1xf32>
    %201 = vector.broadcast %200 : vector<8x1xf32> to vector<8x8xf32>
    %202 = arith.mulf %201, %29 : vector<8x8xf32>
    %203 = arith.addf %199, %202 : vector<8x8xf32>
    %204 = vector.extract_strided_slice %188 {offsets = [0, 3], sizes = [8, 1], strides = [1, 1]} : vector<8x9xf32> to vector<8x1xf32>
    %205 = vector.broadcast %204 : vector<8x1xf32> to vector<8x8xf32>
    %206 = arith.mulf %205, %33 : vector<8x8xf32>
    %207 = arith.addf %203, %206 : vector<8x8xf32>
    %208 = vector.extract_strided_slice %188 {offsets = [0, 4], sizes = [8, 1], strides = [1, 1]} : vector<8x9xf32> to vector<8x1xf32>
    %209 = vector.broadcast %208 : vector<8x1xf32> to vector<8x8xf32>
    %210 = arith.mulf %209, %37 : vector<8x8xf32>
    %211 = arith.addf %207, %210 : vector<8x8xf32>
    %212 = vector.extract_strided_slice %188 {offsets = [0, 5], sizes = [8, 1], strides = [1, 1]} : vector<8x9xf32> to vector<8x1xf32>
    %213 = vector.broadcast %212 : vector<8x1xf32> to vector<8x8xf32>
    %214 = arith.mulf %213, %41 : vector<8x8xf32>
    %215 = arith.addf %211, %214 : vector<8x8xf32>
    %216 = vector.extract_strided_slice %188 {offsets = [0, 6], sizes = [8, 1], strides = [1, 1]} : vector<8x9xf32> to vector<8x1xf32>
    %217 = vector.broadcast %216 : vector<8x1xf32> to vector<8x8xf32>
    %218 = arith.mulf %217, %45 : vector<8x8xf32>
    %219 = arith.addf %215, %218 : vector<8x8xf32>
    %220 = vector.extract_strided_slice %188 {offsets = [0, 7], sizes = [8, 1], strides = [1, 1]} : vector<8x9xf32> to vector<8x1xf32>
    %221 = vector.broadcast %220 : vector<8x1xf32> to vector<8x8xf32>
    %222 = arith.mulf %221, %49 : vector<8x8xf32>
    %223 = arith.addf %219, %222 : vector<8x8xf32>
    %224 = vector.extract_strided_slice %188 {offsets = [0, 8], sizes = [8, 1], strides = [1, 1]} : vector<8x9xf32> to vector<8x1xf32>
    %225 = vector.broadcast %224 : vector<8x1xf32> to vector<8x8xf32>
    %226 = arith.mulf %225, %53 : vector<8x8xf32>
    %227 = arith.addf %223, %226 : vector<8x8xf32>
    %cst_28 = arith.constant dense<0xFF800000> : vector<8xf32>
    %228 = vector.multi_reduction <maximumf>, %227, %cst_28 [1] : vector<8x8xf32> to vector<8xf32>
    %229 = vector.shape_cast %228 : vector<8xf32> to vector<8x1xf32>
    %230 = vector.broadcast %229 : vector<8x1xf32> to vector<8x8xf32>
    %231 = arith.subf %227, %230 : vector<8x8xf32>
    %232 = math.exp %231 : vector<8x8xf32>
    %cst_29 = arith.constant dense<0.000000e+00> : vector<8xf32>
    %233 = vector.multi_reduction <add>, %232, %cst_29 [1] : vector<8x8xf32> to vector<8xf32>
    %234 = vector.shape_cast %233 : vector<8xf32> to vector<8x1xf32>
    %235 = tpu.reciprocal %234 {approx = true} : vector<8x1xf32> -> vector<8x1xf32>
    %236 = vector.broadcast %235 : vector<8x1xf32> to vector<8x8xf32>
    %237 = arith.mulf %232, %236 : vector<8x8xf32>
    %238 = arith.truncf %237 : vector<8x8xf32> to vector<8x8xbf16>
    %cst_30 = arith.constant dense<0.000000e+00> : vector<8x8xf32>
    %239 = tpu.matmul %238, %186, %cst_30 {dimension_numbers = #tpu.dot_dimension_numbers<[1], [0], [0], [1], [0, 0, 1, 1], [], []>} : vector<8x8xbf16>, vector<8x8xbf16>, vector<8x8xf32> -> vector<8x8xf32>
    %c0_31 = arith.constant 0 : index
    %c0_32 = arith.constant 0 : index
    %c16_33 = arith.constant 16 : index
    %240 = vector.load %arg6[%c0_31, %c0_32, %c16_33] : memref<1x8x32xf32, #tpu.memory_space<vmem>>, vector<1x8x8xf32>
    %241 = vector.shape_cast %240 : vector<1x8x8xf32> to vector<8x8xf32>
    %242 = vector.shape_cast %239 : vector<8x8xf32> to vector<1x8x8xf32>
    tpu.vector_store %arg6[%c0_31, %c0_32, %c16_33], %242 {strides = array<i32>} : memref<1x8x32xf32, #tpu.memory_space<vmem>>, vector<1x8x8xf32>,
    %243 = arith.index_cast %4 : i32 to index
    %c24 = arith.constant 24 : index
    %244 = vector.load %arg7[%243, %c24] : memref<8x256xf32, #tpu.memory_space<vmem>>, vector<8x8xf32>
    %245 = arith.truncf %244 : vector<8x8xf32> to vector<8x8xbf16>
    %c0_34 = arith.constant 0 : index
    %c56 = arith.constant 56 : index
    %246 = vector.load %arg7[%c0_34, %c56] : memref<8x256xf32, #tpu.memory_space<vmem>>, vector<8x8xf32>
    %247 = arith.truncf %246 : vector<8x8xf32> to vector<8x8xbf16>
    %c0_35 = arith.constant 0 : index
    %c88 = arith.constant 88 : index
    %248 = vector.load %arg7[%c0_35, %c88] : memref<8x256xf32, #tpu.memory_space<vmem>>, vector<8x8xf32>
    %249 = arith.truncf %248 : vector<8x8xf32> to vector<8x8xbf16>
    %250 = arith.index_cast %4 : i32 to index
    %c123 = arith.constant 123 : index
    %251 = vector.load %arg7[%250, %c123] : memref<8x256xf32, #tpu.memory_space<vmem>>, vector<8x9xf32>
    %cst_36 = arith.constant dense<0.000000e+00> : vector<8x8xf32>
    %252 = tpu.matmul %245, %247, %cst_36 {dimension_numbers = #tpu.dot_dimension_numbers<[1], [1], [0], [0], [0, 0, 1, 0], [], []>} : vector<8x8xbf16>, vector<8x8xbf16>, vector<8x8xf32> -> vector<8x8xf32>
    %253 = vector.broadcast %6 : vector<1x8xf32> to vector<8x8xf32>
    %254 = arith.addf %252, %253 : vector<8x8xf32>
    %255 = vector.extract_strided_slice %251 {offsets = [0, 0], sizes = [8, 1], strides = [1, 1]} : vector<8x9xf32> to vector<8x1xf32>
    %256 = vector.broadcast %255 : vector<8x1xf32> to vector<8x8xf32>
    %257 = arith.mulf %256, %21 : vector<8x8xf32>
    %258 = arith.addf %254, %257 : vector<8x8xf32>
    %259 = vector.extract_strided_slice %251 {offsets = [0, 1], sizes = [8, 1], strides = [1, 1]} : vector<8x9xf32> to vector<8x1xf32>
    %260 = vector.broadcast %259 : vector<8x1xf32> to vector<8x8xf32>
    %261 = arith.mulf %260, %25 : vector<8x8xf32>
    %262 = arith.addf %258, %261 : vector<8x8xf32>
    %263 = vector.extract_strided_slice %251 {offsets = [0, 2], sizes = [8, 1], strides = [1, 1]} : vector<8x9xf32> to vector<8x1xf32>
    %264 = vector.broadcast %263 : vector<8x1xf32> to vector<8x8xf32>
    %265 = arith.mulf %264, %29 : vector<8x8xf32>
    %266 = arith.addf %262, %265 : vector<8x8xf32>
    %267 = vector.extract_strided_slice %251 {offsets = [0, 3], sizes = [8, 1], strides = [1, 1]} : vector<8x9xf32> to vector<8x1xf32>
    %268 = vector.broadcast %267 : vector<8x1xf32> to vector<8x8xf32>
    %269 = arith.mulf %268, %33 : vector<8x8xf32>
    %270 = arith.addf %266, %269 : vector<8x8xf32>
    %271 = vector.extract_strided_slice %251 {offsets = [0, 4], sizes = [8, 1], strides = [1, 1]} : vector<8x9xf32> to vector<8x1xf32>
    %272 = vector.broadcast %271 : vector<8x1xf32> to vector<8x8xf32>
    %273 = arith.mulf %272, %37 : vector<8x8xf32>
    %274 = arith.addf %270, %273 : vector<8x8xf32>
    %275 = vector.extract_strided_slice %251 {offsets = [0, 5], sizes = [8, 1], strides = [1, 1]} : vector<8x9xf32> to vector<8x1xf32>
    %276 = vector.broadcast %275 : vector<8x1xf32> to vector<8x8xf32>
    %277 = arith.mulf %276, %41 : vector<8x8xf32>
    %278 = arith.addf %274, %277 : vector<8x8xf32>
    %279 = vector.extract_strided_slice %251 {offsets = [0, 6], sizes = [8, 1], strides = [1, 1]} : vector<8x9xf32> to vector<8x1xf32>
    %280 = vector.broadcast %279 : vector<8x1xf32> to vector<8x8xf32>
    %281 = arith.mulf %280, %45 : vector<8x8xf32>
    %282 = arith.addf %278, %281 : vector<8x8xf32>
    %283 = vector.extract_strided_slice %251 {offsets = [0, 7], sizes = [8, 1], strides = [1, 1]} : vector<8x9xf32> to vector<8x1xf32>
    %284 = vector.broadcast %283 : vector<8x1xf32> to vector<8x8xf32>
    %285 = arith.mulf %284, %49 : vector<8x8xf32>
    %286 = arith.addf %282, %285 : vector<8x8xf32>
    %287 = vector.extract_strided_slice %251 {offsets = [0, 8], sizes = [8, 1], strides = [1, 1]} : vector<8x9xf32> to vector<8x1xf32>
    %288 = vector.broadcast %287 : vector<8x1xf32> to vector<8x8xf32>
    %289 = arith.mulf %288, %53 : vector<8x8xf32>
    %290 = arith.addf %286, %289 : vector<8x8xf32>
    %cst_37 = arith.constant dense<0xFF800000> : vector<8xf32>
    %291 = vector.multi_reduction <maximumf>, %290, %cst_37 [1] : vector<8x8xf32> to vector<8xf32>
    %292 = vector.shape_cast %291 : vector<8xf32> to vector<8x1xf32>
    %293 = vector.broadcast %292 : vector<8x1xf32> to vector<8x8xf32>
    %294 = arith.subf %290, %293 : vector<8x8xf32>
    %295 = math.exp %294 : vector<8x8xf32>
    %cst_38 = arith.constant dense<0.000000e+00> : vector<8xf32>
    %296 = vector.multi_reduction <add>, %295, %cst_38 [1] : vector<8x8xf32> to vector<8xf32>
    %297 = vector.shape_cast %296 : vector<8xf32> to vector<8x1xf32>
    %298 = tpu.reciprocal %297 {approx = true} : vector<8x1xf32> -> vector<8x1xf32>
    %299 = vector.broadcast %298 : vector<8x1xf32> to vector<8x8xf32>
    %300 = arith.mulf %295, %299 : vector<8x8xf32>
    %301 = arith.truncf %300 : vector<8x8xf32> to vector<8x8xbf16>
    %cst_39 = arith.constant dense<0.000000e+00> : vector<8x8xf32>
    %302 = tpu.matmul %301, %249, %cst_39 {dimension_numbers = #tpu.dot_dimension_numbers<[1], [0], [0], [1], [0, 0, 1, 1], [], []>} : vector<8x8xbf16>, vector<8x8xbf16>, vector<8x8xf32> -> vector<8x8xf32>
    %c0_40 = arith.constant 0 : index
    %c0_41 = arith.constant 0 : index
    %c24_42 = arith.constant 24 : index
    %303 = vector.load %arg6[%c0_40, %c0_41, %c24_42] : memref<1x8x32xf32, #tpu.memory_space<vmem>>, vector<1x8x8xf32>
    %304 = vector.shape_cast %303 : vector<1x8x8xf32> to vector<8x8xf32>
    %305 = vector.shape_cast %302 : vector<8x8xf32> to vector<1x8x8xf32>
    tpu.vector_store %arg6[%c0_40, %c0_41, %c24_42], %305 {strides = array<i32>} : memref<1x8x32xf32, #tpu.memory_space<vmem>>, vector<1x8x8xf32>,
    return
  }
  func.func @transform_0(%arg0: i32, %arg1: i32) -> (i32, i32, i32) {
    %c0_i32 = arith.constant 0 : i32
    %c0_i32_0 = arith.constant 0 : i32
    %c0_i32_1 = arith.constant 0 : i32
    return %arg0, %c0_i32, %c0_i32_0 : i32, i32, i32
  }
  func.func @transform_1(%arg0: i32, %arg1: i32) -> (i32, i32) {
    %c0_i32 = arith.constant 0 : i32
    %c0_i32_0 = arith.constant 0 : i32
    %c0_i32_1 = arith.constant 0 : i32
    return %c0_i32, %c0_i32_0 : i32, i32
  }
  func.func @transform_2(%arg0: i32, %arg1: i32) -> (i32, i32) {
    %c0_i32 = arith.constant 0 : i32
    %c0_i32_0 = arith.constant 0 : i32
    %c0_i32_1 = arith.constant 0 : i32
    return %c0_i32, %c0_i32_0 : i32, i32
  }
  func.func @transform_3(%arg0: i32, %arg1: i32) -> (i32, i32, i32) {
    %c0_i32 = arith.constant 0 : i32
    %c0_i32_0 = arith.constant 0 : i32
    %c0_i32_1 = arith.constant 0 : i32
    return %arg0, %c0_i32, %c0_i32_0 : i32, i32, i32
  }
  func.func @transform_4(%arg0: i32, %arg1: i32) -> (i32, i32, i32) {
    %c0_i32 = arith.constant 0 : i32
    %c0_i32_0 = arith.constant 0 : i32
    return %arg0, %arg1, %c0_i32 : i32, i32, i32
  }
}

</mosaic_0001>

<llo_original>
// kernel: tpu_custom_call.1
$region0: #{tpu_custom_call.1}
  #allocation0 [shape = 'u32[]', space=smem, size = 0x4, offset = 0x4, fixed_abs, tag = 'smem constant byte address 0x4 - core index']
  #allocation1 [shape = 'u32[144,128]{1,0:T(1,128)}', space=vmem, size = 0x12000, scoped, tag = 'internal scratch']
  #allocation2 [shape = 'f32[8,256]{1,0:T(8,128)}', space=vmem, size = 0x2000, scoped, tag = 'scratch operand']
  %s0 = inlined_call_operand.hbm [shape: f32[2,8,32], index: 0, kind: input, shape index: {}]
  %s1 = inlined_call_operand.hbm [shape: bf16[32,256], index: 1, kind: input, shape index: {}]
  %s2 = inlined_call_operand.vmem [shape: f32[1,256], index: 2, kind: input, shape index: {}]
  %s3 = inlined_call_operand.vmem [shape: f32[2,1,8], index: 3, kind: input, shape index: {}]
  %s4 = inlined_call_operand.hbm [shape: f32[2,8,32], index: 4, kind: output, shape index: {}]
  %s5 = sld [smem:[#allocation0]]
  $region61: #{tpu_custom_call.1} parent=0
    _
  %s7 = ssub.s32 1, %s5
  %s8 = scalar_select 0, %s7, %s5
  $region1: #{tpu_custom_call.1} parent=0
    #allocation3 [shape = 'u8[8192]{0}', space=vmem, size = 0x2000, scoped, tag = 'input window, operand 0']
    #allocation4 [shape = 's32[2]{0}', space=sflag, size = 0x8, scoped, tag = 'scoped memory for tpu_custom_call.1']
    #allocation5 [shape = 's32[2]{0}', space=sflag, size = 0x8, scoped, tag = 'scoped memory for tpu_custom_call.1']
    #allocation6 [shape = 'u8[16384]{0}', space=vmem, size = 0x4000, scoped, tag = 'input window, operand 1, single buffered']
    #allocation7 [shape = 's32[1]{0}', space=sflag, size = 0x4, scoped, tag = 'scoped memory for tpu_custom_call.1']
    #allocation8 [shape = 'u8[8192]{0}', space=vmem, size = 0x2000, scoped, tag = 'output window, operand 0']
    %9 = vsyncpa [#allocation4], 0
    %s10 = scalar_lea.sflag [#allocation4], 1
    %11 = vsyncpa %s10, 0
    %12 = vsyncpa [#allocation7], 0
    %13 = vsyncpa [#allocation5], 0
    %s14 = scalar_lea.sflag [#allocation5], 1
    %15 = vsyncpa %s14, 0
    loop: start=0, step=1, limit=4
    $region2: #{tpu_custom_call.1} parent=1 // loop_pre_header
      _
    $region3: #{tpu_custom_call.1} parent=1 // loop_header
      %s17 = sphi 0, %s21
      %p18 = scmp.ge.s32.totalorder %s17, 4
      %s24 = sphi 0, %s36
      %s25 = sphi 0, %s32
      %s26 = sphi 0, %s24
      %s27 = sphi 0, %s25
      %s28 = sphi 0, %s26
      %s29 = sphi 0, %s27
      %s39 = sphi 0, %s41
      %s42 = sphi 0, %s39
      %s43 = sphi 0, %s42
      %s59 = sphi 0, %s43
      %s63 = sphi 0, %s63
      %s65 = sphi 0, %s63
      %s66 = sphi 0, %s65
      %s80 = sphi 0, %s66
      %s84 = sphi 0, %s84
      %s86 = sphi 0, %s84
      %s87 = sphi 0, %s86
      %s101 = sphi 0, %s87
      %s107 = sphi 0, %s109
      %s110 = sphi 0, %s107
      %s111 = sphi 0, %s110
      %s127 = sphi 0, %s111
      %s135 = sphi 0, %s137
      %s138 = sphi 0, %s135
      %s139 = sphi 0, %s138
      %s155 = sphi 0, %s139
    $region4: #{tpu_custom_call.1} parent=1 // loop_header_branch
      %20 = sbr.rel (%p18) target = $region8
    $region5: #{tpu_custom_call.1} parent=1 // loop_body
      %s22 = ssub.s32 %s17, 1
      %s23 = ssub.s32 %s17, 2
      %s30 = sadd.s32 1, %s25
      %p31 = scmp.ge.s32.totalorder %s30, 1
      %s32 = scalar_select %p31, 0, %s30
      %s33 = sadd.s32 1, %s24
      %s34 = scalar_select %p31, %s33, %s24
      %p35 = scmp.ge.s32.totalorder %s34, 2
      %s36 = scalar_select %p35, 0, %s34
      %s37 = ssub.s32 %s24, %s36
      %p38 = scmp.eq.s32.totalorder %s37, 0
      %s40 = sadd.s32 %s39, 1
      %s41 = scalar_select %p38, %s39, %s40
      %p44 = pneg %p38
      %p45 = scmp.eq.s32.totalorder %s17, 1
      %p46 = por %p44, %p45
      %p47 = scmp.ne.s32.totalorder %s39, %s42
      %p48 = scmp.eq.s32.totalorder %s17, 0
      %p49 = por %p47, %p48
      %p50 = scmp.ne.s32.totalorder %s39, %s42
      %p51 = scmp.eq.s32.totalorder %s22, 1
      %p52 = por %p50, %p51
      %p53 = scmp.ne.s32.totalorder %s42, %s43
      %p54 = scmp.eq.s32.totalorder %s22, 0
      %p55 = por %p53, %p54
      %p56 = scmp.ne.s32.totalorder %s42, %s43
      %p57 = scmp.eq.s32.totalorder %s23, 1
      %p58 = por %p56, %p57
      %p60 = scmp.ne.s32.totalorder %s43, %s59
      %p61 = scmp.eq.s32.totalorder %s23, 0
      %p62 = por %p60, %p61
      %s64 = sadd.s32 %s63, 1
      %p67 = scmp.eq.s32.totalorder %s17, 1
      %p68 = scmp.ne.s32.totalorder %s63, %s65
      %p69 = scmp.eq.s32.totalorder %s17, 0
      %p70 = por %p68, %p69
      %p71 = scmp.ne.s32.totalorder %s63, %s65
      %p72 = scmp.eq.s32.totalorder %s22, 1
      %p73 = por %p71, %p72
      %p74 = scmp.ne.s32.totalorder %s65, %s66
      %p75 = scmp.eq.s32.totalorder %s22, 0
      %p76 = por %p74, %p75
      %p77 = scmp.ne.s32.totalorder %s65, %s66
      %p78 = scmp.eq.s32.totalorder %s23, 1
      %p79 = por %p77, %p78
      %p81 = scmp.ne.s32.totalorder %s66, %s80
      %p82 = scmp.eq.s32.totalorder %s23, 0
      %p83 = por %p81, %p82
      %s85 = sadd.s32 %s84, 1
      %p88 = scmp.eq.s32.totalorder %s17, 1
      %p89 = scmp.ne.s32.totalorder %s84, %s86
      %p90 = scmp.eq.s32.totalorder %s17, 0
      %p91 = por %p89, %p90
      %p92 = scmp.ne.s32.totalorder %s84, %s86
      %p93 = scmp.eq.s32.totalorder %s22, 1
      %p94 = por %p92, %p93
      %p95 = scmp.ne.s32.totalorder %s86, %s87
      %p96 = scmp.eq.s32.totalorder %s22, 0
      %p97 = por %p95, %p96
      %p98 = scmp.ne.s32.totalorder %s86, %s87
      %p99 = scmp.eq.s32.totalorder %s23, 1
      %p100 = por %p98, %p99
      %p102 = scmp.ne.s32.totalorder %s87, %s101
      %p103 = scmp.eq.s32.totalorder %s23, 0
      %p104 = por %p102, %p103
      %s105 = ssub.s32 %s24, %s36
      %p106 = scmp.eq.s32.totalorder %s105, 0
      %s108 = sadd.s32 %s107, 1
      %s109 = scalar_select %p106, %s107, %s108
      %p112 = pneg %p106
      %p113 = scmp.eq.s32.totalorder %s17, 1
      %p114 = por %p112, %p113
      %p115 = scmp.ne.s32.totalorder %s107, %s110
      %p116 = scmp.eq.s32.totalorder %s17, 0
      %p117 = por %p115, %p116
      %p118 = scmp.ne.s32.totalorder %s107, %s110
      %p119 = scmp.eq.s32.totalorder %s22, 1
      %p120 = por %p118, %p119
      %p121 = scmp.ne.s32.totalorder %s110, %s111
      %p122 = scmp.eq.s32.totalorder %s22, 0
      %p123 = por %p121, %p122
      %p124 = scmp.ne.s32.totalorder %s110, %s111
      %p125 = scmp.eq.s32.totalorder %s23, 1
      %p126 = por %p124, %p125
      %p128 = scmp.ne.s32.totalorder %s111, %s127
      %p129 = scmp.eq.s32.totalorder %s23, 0
      %p130 = por %p128, %p129
      %s131 = ssub.s32 %s24, %s36
      %s132 = ssub.s32 %s25, %s32
      %s133 = sor.u32 %s131, %s132
      %p134 = scmp.eq.s32.totalorder %s133, 0
      %s136 = sadd.s32 %s135, 1
      %s137 = scalar_select %p134, %s135, %s136
      %p140 = pneg %p134
      %p141 = scmp.eq.s32.totalorder %s17, 1
      %p142 = por %p140, %p141
      %p143 = scmp.ne.s32.totalorder %s135, %s138
      %p144 = scmp.eq.s32.totalorder %s17, 0
      %p145 = por %p143, %p144
      %p146 = scmp.ne.s32.totalorder %s135, %s138
      %p147 = scmp.eq.s32.totalorder %s22, 1
      %p148 = por %p146, %p147
      %p149 = scmp.ne.s32.totalorder %s138, %s139
      %p150 = scmp.eq.s32.totalorder %s22, 0
      %p151 = por %p149, %p150
      %p152 = scmp.ne.s32.totalorder %s138, %s139
      %p153 = scmp.eq.s32.totalorder %s23, 1
      %p154 = por %p152, %p153
      %p156 = scmp.ne.s32.totalorder %s139, %s155
      %p157 = scmp.eq.s32.totalorder %s23, 0
      %p158 = por %p156, %p157
      %p159 = scmp.le.s32.totalorder 1, %s17
      %p160 = scmp.lt.s32.totalorder %s17, 3
      %p161 = pnand %p159, %p160
      %p162 = pneg %p161
      // Predicated region
      $region9: #{tpu_custom_call.1} parent=5 // pred_check
        _
      $region10: #{tpu_custom_call.1} parent=5 // pred_check_branch
        %164 = sbr.rel (%p161) target = $region12
      $region11: #{tpu_custom_call.1} parent=5 // pred_region
        %s165 = ssub.s32 %s17, 1
        // Predicated region
        $region13: #{tpu_custom_call.1} parent=11 // pred_check
          %p166 = pneg %p76
        $region14: #{tpu_custom_call.1} parent=11 // pred_check_branch
          %168 = sbr.rel (%p166) target = $region16
        $region15: #{tpu_custom_call.1} parent=11 // pred_region
          %s170 = ssub.s32 512, 512
          %171 = vsyncadd [#allocation7], %s170
          %s172 = sshll.u32 [#allocation6], 4
          %s173 = int_to_ptr.vmem [resolvable:$true] %s172
          %178 = dma.hbm_to_vmem [thread:$0]  %s1, 512, %s173, [#allocation7], 128, 128, 8
        $region16: #{tpu_custom_call.1} parent=11 // pred_fallthru
          _
        // Predicated region
        $region17: #{tpu_custom_call.1} parent=11 // pred_check
          %p179 = pneg %p97
        $region18: #{tpu_custom_call.1} parent=11 // pred_check_branch
          %181 = sbr.rel (%p179) target = $region20
        $region19: #{tpu_custom_call.1} parent=11 // pred_region
          _
        $region20: #{tpu_custom_call.1} parent=11 // pred_fallthru
          _
      $region12: #{tpu_custom_call.1} parent=5 // pred_fallthru
        _
      %p182 = scmp.lt.s32.totalorder %s17, 2
      // Predicated region
      $region21: #{tpu_custom_call.1} parent=5 // pred_check
        %p183 = pneg %p182
      $region22: #{tpu_custom_call.1} parent=5 // pred_check_branch
        %185 = sbr.rel (%p183) target = $region24
      $region23: #{tpu_custom_call.1} parent=5 // pred_region
        // Predicated region
        $region25: #{tpu_custom_call.1} parent=23 // pred_check
          %p186 = pneg %p49
        $region26: #{tpu_custom_call.1} parent=23 // pred_check_branch
          %188 = sbr.rel (%p186) target = $region28
        $region27: #{tpu_custom_call.1} parent=23 // pred_region
          %s189 = sand.u32 %s39, 1
          %s190 = scalar_lea.sflag [#allocation4], %s189
          %s191 = sand.u32 %s39, 1
          %s192 = smul.addr %s191, 8
          %s193 = scalar_lea.vmem [#allocation3], %s192
          %s195 = ssub.s32 128, 128
          %196 = vsyncadd %s190, %s195
          %s197 = smul.addr %s24, 128
          %s198 = scalar_lea.hbm %s0, %s197
          %s200 = sshll.u32 %s193, 4
          %s201 = int_to_ptr.vmem [resolvable:$true] %s200
          %203 = dma.hbm_to_vmem [thread:$0]  %s198, 128, %s201, %s190
        $region28: #{tpu_custom_call.1} parent=23 // pred_fallthru
          _
        // Predicated region
        $region29: #{tpu_custom_call.1} parent=23 // pred_check
          %p204 = pneg %p117
        $region30: #{tpu_custom_call.1} parent=23 // pred_check_branch
          %206 = sbr.rel (%p204) target = $region32
        $region31: #{tpu_custom_call.1} parent=23 // pred_region
          %p207 = scmp.lt.s32.totalorder %s24, 1
          %s208 = scalar_select %p207, %s24, 1
          %s209 = scalar_lea.vmem %s3, %s208
        $region32: #{tpu_custom_call.1} parent=23 // pred_fallthru
          _
      $region24: #{tpu_custom_call.1} parent=5 // pred_fallthru
        _
      %p210 = scmp.le.s32.totalorder 1, %s17
      %p211 = scmp.lt.s32.totalorder %s17, 3
      %p212 = pnand %p210, %p211
      %p213 = pneg %p212
      // Predicated region
      $region33: #{tpu_custom_call.1} parent=5 // pred_check
        _
      $region34: #{tpu_custom_call.1} parent=5 // pred_check_branch
        %215 = sbr.rel (%p212) target = $region36
      $region35: #{tpu_custom_call.1} parent=5 // pred_region
        %s216 = ssub.s32 %s17, 1
        %s217 = sand.u32 %s42, 1
        %s218 = scalar_lea.sflag [#allocation4], %s217
        %s219 = sand.u32 %s42, 1
        %s220 = smul.addr %s219, 8
        %s221 = scalar_lea.vmem [#allocation3], %s220
        // Predicated region
        $region37: #{tpu_custom_call.1} parent=35 // pred_check
          %p222 = pneg %p55
        $region38: #{tpu_custom_call.1} parent=35 // pred_check_branch
          %224 = sbr.rel (%p222) target = $region40
        $region39: #{tpu_custom_call.1} parent=35 // pred_region
          %225 = dma.done %s218, 128
        $region40: #{tpu_custom_call.1} parent=35 // pred_fallthru
          _
        // Predicated region
        $region41: #{tpu_custom_call.1} parent=35 // pred_check
          %p226 = pneg %p76
        $region42: #{tpu_custom_call.1} parent=35 // pred_check_branch
          %228 = sbr.rel (%p226) target = $region44
        $region43: #{tpu_custom_call.1} parent=35 // pred_region
          %229 = dma.done [#allocation7], 512
        $region44: #{tpu_custom_call.1} parent=35 // pred_fallthru
          _
        %s230 = sand.u32 %s42, 1
        %s231 = scalar_lea.sflag [#allocation4], %s230
        %s232 = sand.u32 %s42, 1
        %s233 = smul.addr %s232, 8
        %s234 = scalar_lea.vmem [#allocation3], %s233
        %p235 = pneg %p55
        %p236 = pneg %p52
        %p237 = pneg %p76
        %p238 = pneg %p73
        %p239 = pneg %p97
        %p240 = pneg %p94
        %p241 = scmp.lt.s32.totalorder %s26, 1
        %s242 = scalar_select %p241, %s26, 1
        %s243 = scalar_lea.vmem %s3, %s242
        %p244 = pneg %p123
        %p245 = pneg %p120
        %p246 = pneg %p151
        %p247 = pneg %p148
        %s248 = sand.u32 %s138, 1
        %s249 = scalar_lea.sflag [#allocation5], %s248
        %s250 = sand.u32 %s138, 1
        %s251 = smul.addr %s250, 8
        %s252 = scalar_lea.vmem [#allocation8], %s251
        %p253 = scmp.lt.s32.totalorder %s26, 1
        %s254 = scalar_select %p253, %s26, 1
        %s255 = scalar_lea.vmem %s3, %s254
        %p257 = scmp.eq.s32.totalorder %s27, 0
        // Predicated region
        $region45: #{tpu_custom_call.1} parent=35 // pred_check
          %p258 = pneg %p257
        $region46: #{tpu_custom_call.1} parent=35 // pred_check_branch
          %260 = sbr.rel (%p258) target = $region48
        $region47: #{tpu_custom_call.1} parent=35 // pred_region
          %v261 = vld [vmem:[%s221] sm:$0xff]
          %v262 = vpack.c.bf16 %v261, %v261
          %v263 = vld [vmem:[#allocation6] sm:$0xff]
          %v264 = vld [vmem:[#allocation6 + $0x8] sm:$0xff]
          %v265 = vld [vmem:[#allocation6 + $0x10] sm:$0xff]
          %v266 = vld [vmem:[#allocation6 + $0x18] sm:$0xff]
          %v267 = vld [vmem:[%s2] sm:$0x3]
          %v269 = vlaneseq
          %v270 = vshrl.u32 %v269, 7
          %v271 = vsub.s32 0, %v270
          %v272 = vrot.slane %v267, %v271
          %v273 = vlaneseq
          %v274 = vshrl.u32 %v273, 7
          %v275 = vsub.s32 1, %v274
          %v276 = vrot.slane %v267, %v275
          %v283 = vunpack.c.l.b16 %v263
          %v284 = vunpack.c.h.b16 %v263
          %v285 = vunpack.c.l.b16 %v264
          %v286 = vunpack.c.h.b16 %v264
          %v287 = vunpack.c.l.b16 %v265
          %v288 = vunpack.c.h.b16 %v265
          %v289 = vunpack.c.l.b16 %v266
          %v290 = vunpack.c.h.b16 %v266
          %v291 = vpack.c.b16 %v285, %v283
          %v292 = vpack.c.b16 %v286, %v284
          %v293 = vpack.c.b16 %v289, %v287
          %v294 = vpack.c.b16 %v290, %v288
          %vm299 = vcmask 261120
          %v301 = vsel %vm299, %v262, 0
          %303 = vmatprep.subr.bf16.mxu0 %v292
          %304 = vmatpush1.bf16.msra.mxu0 %v291
          %305 = vmatprep.subr.bf16.mxu0 %v294
          %306 = vmatpush1.bf16.msra.mxu0 %v293
          %307 = vmatprep.subr.bf16.mxu0 0
          %308 = vmatpush1.bf16.msra.mxu0 0
          %309 = vmatprep.subr.bf16.mxu0 0
          %310 = vmatpush1.bf16.msra.mxu0 0
          %311 = vmatprep.subr.bf16.mxu0 0
          %312 = vmatpush1.bf16.msra.mxu0 0
          %313 = vmatprep.subr.bf16.mxu0 0
          %314 = vmatpush1.bf16.msra.mxu0 0
          %315 = vmatprep.subr.bf16.mxu0 0
          %316 = vmatpush1.bf16.msra.mxu0 0
          %317 = vmatprep.subr.bf16.mxu0 0
          %318 = vmatpush1.bf16.msra.mxu0 0
          %319 = vmatprep.subr.bf16.mxu0 0
          %320 = vmatpush1.bf16.msra.mxu0 0
          %321 = vmatprep.subr.bf16.mxu0 0
          %322 = vmatpush1.bf16.msra.mxu0 0
          %323 = vmatprep.subr.bf16.mxu0 0
          %324 = vmatpush1.bf16.msra.mxu0 0
          %325 = vmatprep.subr.bf16.mxu0 0
          %326 = vmatpush1.bf16.msra.mxu0 0
          %327 = vmatprep.subr.bf16.mxu0 0
          %328 = vmatpush1.bf16.msra.mxu0 0
          %329 = vmatprep.subr.bf16.mxu0 0
          %330 = vmatpush1.bf16.msra.mxu0 0
          %331 = vmatprep.subr.bf16.mxu0 0
          %332 = vmatpush1.bf16.msra.mxu0 0
          %333 = vmatprep.subr.bf16.mxu0 0
          %334 = vmatpush1.bf16.msra.mxu0 0
          %335 = vmatprep.mubr.bf16.mxu0 0
          %336 = vmatmul.mubr.bf16.gmra.mrb[0].mxu0 %v301
          %v337 = vpop.f32.mrb[0].mxu0
          %v338 = vadd.f32 %v272, %v337
          %v339 = vpop.f32.mrb[0].mxu0
          %v340 = vadd.f32 %v276, %v339
          %v341 = vpop.f32.mrb[0].mxu0
          %v342 = vpop.f32.mrb[0].mxu0
          %343 = vdwg.mxu0
          %344 = vst [vmem:[#allocation2] sm:$0xff] %v338
          %345 = vst [vmem:[#allocation2 + $0x8] sm:$0xff] %v340
        $region48: #{tpu_custom_call.1} parent=35 // pred_fallthru
          _
        %s346 = smul.u32 %s27, 8
        %v347 = vld [vmem:[%s255] sm:$0x1]
        %v348 = vlaneseq
        %v349 = vshrl.u32 %v348, 7
        %v350 = vstv %s346
        %v351 = vadd.s32 %v349, %v350
        %v352 = vlaneseq
        %v353 = vand.u32 %v352, 127
        %v354 = vsub.s32 %v353, %v351
        %vm355 = vcmp.gt.s32.totalorder %v354, 4294967292
        %v356 = vsel %vm355, %v354, 4294967292
        %vm357 = vcmp.lt.s32.totalorder %v356, 4
        %v358 = vsel %vm357, %v356, 4
        %v359 = vadd.s32 %v358, 4
        %vm360 = vcmp.eq.s32.totalorder %v359, 0
        %v361 = vsel %vm360, 1, 0
        %v362 = vcvt.s32.f32 %v361
        %vm363 = vcmp.eq.s32.totalorder %v359, 1
        %v364 = vsel %vm363, 1, 0
        %v365 = vcvt.s32.f32 %v364
        %vm366 = vcmp.eq.s32.totalorder %v359, 2
        %v367 = vsel %vm366, 1, 0
        %v368 = vcvt.s32.f32 %v367
        %vm369 = vcmp.eq.s32.totalorder %v359, 3
        %v370 = vsel %vm369, 1, 0
        %v371 = vcvt.s32.f32 %v370
        %vm372 = vcmp.eq.s32.totalorder %v359, 4
        %v373 = vsel %vm372, 1, 0
        %v374 = vcvt.s32.f32 %v373
        %vm375 = vcmp.eq.s32.totalorder %v359, 5
        %v376 = vsel %vm375, 1, 0
        %v377 = vcvt.s32.f32 %v376
        %vm378 = vcmp.eq.s32.totalorder %v359, 6
        %v379 = vsel %vm378, 1, 0
        %v380 = vcvt.s32.f32 %v379
        %vm381 = vcmp.eq.s32.totalorder %v359, 7
        %v382 = vsel %vm381, 1, 0
        %v383 = vcvt.s32.f32 %v382
        %vm384 = vcmp.eq.s32.totalorder %v359, 8
        %v385 = vsel %vm384, 1, 0
        %v386 = vcvt.s32.f32 %v385
        %s387 = sshra.s32 %s346, 3
        %s388 = sand.u32 %s346, 7
        %s389 = smul.u32 %s387, 2
        %s390 = smul.addr %s389, 8
        %s391 = scalar_lea.vmem [#allocation2], %s390
        %v392 = vld [vmem:[%s391] sm:$0xff]
        %v393 = vpack.c.bf16 %v392, %v392
        %v394 = vld [vmem:[#allocation2] sm:$0xff]
        %v395 = vpack.c.bf16 %v394, %v394
        %v397 = vlaneseq
        %v398 = vshrl.u32 %v397, 7
        %v399 = vsub.s32 0, %v398
        %v400 = vrot.slane %v347, %v399
        %403 = vrot.lane.b32.xlu0 %v395, 96
        %v404 = vpop.permute.xlu0 %403
        %vm405 = vcmask 64512
        %v407 = vsel %vm405, %v393, 0
        %v410 = vsel %vm405, %v404, 0
        %412 = vmatprep.subr.bf16.mxu0 0
        %413 = vmatpush1.bf16.xpose.msra.mxu0 %v410
        %414 = vmatprep.subr.bf16.mxu0 0
        %415 = vmatpush1.bf16.xpose.msra.mxu0 0
        %416 = vmatprep.subr.bf16.mxu0 0
        %417 = vmatpush1.bf16.xpose.msra.mxu0 0
        %418 = vmatprep.subr.bf16.mxu0 0
        %419 = vmatpush1.bf16.xpose.msra.mxu0 0
        %420 = vmatprep.subr.bf16.mxu0 0
        %421 = vmatpush1.bf16.xpose.msra.mxu0 0
        %422 = vmatprep.subr.bf16.mxu0 0
        %423 = vmatpush1.bf16.xpose.msra.mxu0 0
        %424 = vmatprep.subr.bf16.mxu0 0
        %425 = vmatpush1.bf16.xpose.msra.mxu0 0
        %426 = vmatprep.subr.bf16.mxu0 0
        %427 = vmatpush1.bf16.xpose.msra.mxu0 0
        %428 = vmatprep.subr.bf16.mxu0 0
        %429 = vmatpush1.bf16.xpose.msra.mxu0 0
        %430 = vmatprep.subr.bf16.mxu0 0
        %431 = vmatpush1.bf16.xpose.msra.mxu0 0
        %432 = vmatprep.subr.bf16.mxu0 0
        %433 = vmatpush1.bf16.xpose.msra.mxu0 0
        %434 = vmatprep.subr.bf16.mxu0 0
        %435 = vmatpush1.bf16.xpose.msra.mxu0 0
        %436 = vmatprep.subr.bf16.mxu0 0
        %437 = vmatpush1.bf16.xpose.msra.mxu0 0
        %438 = vmatprep.subr.bf16.mxu0 0
        %439 = vmatpush1.bf16.xpose.msra.mxu0 0
        %440 = vmatprep.subr.bf16.mxu0 0
        %441 = vmatpush1.bf16.xpose.msra.mxu0 0
        %442 = vmatprep.subr.bf16.mxu0 0
        %443 = vmatpush1.bf16.xpose.msra.mxu0 0
        %444 = vmatprep.mubr.bf16.mxu0 0
        %445 = vmatmul.mubr.bf16.gmra.mrb[0].mxu0 %v407
        %v446 = vpop.f32.mrb[0].mxu0
        %v447 = vadd.f32 %v400, %v446
        %v448 = vpop.f32.mrb[0].mxu0
        %v449 = vpop.f32.mrb[0].mxu0
        %v450 = vpop.f32.mrb[0].mxu0
        %451 = vdwg.mxu0
        %453 = vset.pattern.permute.xlu0 96
        %454 = vperm.xlu0 %453, %v392
        %v455 = vpop.permute.xlu0 %454
        %v457 = vmul.f32 %v455, %v362
        %v458 = vadd.f32 %v447, %v457
        %459 = vset.pattern.permute.xlu0 97
        %460 = vperm.xlu0 %459, %v392
        %v461 = vpop.permute.xlu0 %460
        %v463 = vmul.f32 %v461, %v365
        %v464 = vadd.f32 %v458, %v463
        %465 = vset.pattern.permute.xlu0 98
        %466 = vperm.xlu0 %465, %v392
        %v467 = vpop.permute.xlu0 %466
        %v469 = vmul.f32 %v467, %v368
        %v470 = vadd.f32 %v464, %v469
        %471 = vset.pattern.permute.xlu0 99
        %472 = vperm.xlu0 %471, %v392
        %v473 = vpop.permute.xlu0 %472
        %v475 = vmul.f32 %v473, %v371
        %v476 = vadd.f32 %v470, %v475
        %477 = vset.pattern.permute.xlu0 100
        %478 = vperm.xlu0 %477, %v392
        %v479 = vpop.permute.xlu0 %478
        %v481 = vmul.f32 %v479, %v374
        %v482 = vadd.f32 %v476, %v481
        %483 = vset.pattern.permute.xlu0 101
        %484 = vperm.xlu0 %483, %v392
        %v485 = vpop.permute.xlu0 %484
        %v487 = vmul.f32 %v485, %v377
        %v488 = vadd.f32 %v482, %v487
        %489 = vset.pattern.permute.xlu0 102
        %490 = vperm.xlu0 %489, %v392
        %v491 = vpop.permute.xlu0 %490
        %v493 = vmul.f32 %v491, %v380
        %v494 = vadd.f32 %v488, %v493
        %495 = vset.pattern.permute.xlu0 103
        %496 = vperm.xlu0 %495, %v392
        %v497 = vpop.permute.xlu0 %496
        %v499 = vmul.f32 %v497, %v383
        %v500 = vadd.f32 %v494, %v499
        %501 = vset.pattern.permute.xlu0 104
        %502 = vperm.xlu0 %501, %v392
        %v503 = vpop.permute.xlu0 %502
        %v505 = vmul.f32 %v503, %v386
        %v506 = vadd.f32 %v500, %v505
        %v507 = vsel %vm405, %v506, -inf
        %508 = vmax.xlane.f32.xlu0 %v507
        %v509 = vpop.xlane.xlu0 %508
        %v510 = vsub.f32 %v506, %v509
        %v511 = vmul.f32 %v510, 1.442695
        %v512 = vpow.pop %v511
        %v513 = vsel %vm405, %v512, 0.0
        %514 = vadd.xlane.f32.xlu0 %v513
        %v515 = vpop.xlane.xlu0 %514
        %v516 = vrcp.pop %v515
        %v517 = vmul.f32 %v512, %v516
        %v518 = vpack.c.bf16 %v517, %v517
        %519 = vrot.lane.b32.xlu0 %v395, 64
        %v520 = vpop.permute.xlu0 %519
        %v522 = vsel %vm405, %v518, 0
        %vm524 = vcmask 1043456
        %v526 = vsel %vm524, %v520, 0
        %528 = vmatprep.subr.bf16.mxu0 0
        %529 = vmatpush1.bf16.msra.mxu0 %v526
        %530 = vmatprep.subr.bf16.mxu0 0
        %531 = vmatpush1.bf16.msra.mxu0 0
        %532 = vmatprep.subr.bf16.mxu0 0
        %533 = vmatpush1.bf16.msra.mxu0 0
        %534 = vmatprep.subr.bf16.mxu0 0
        %535 = vmatpush1.bf16.msra.mxu0 0
        %536 = vmatprep.subr.bf16.mxu0 0
        %537 = vmatpush1.bf16.msra.mxu0 0
        %538 = vmatprep.subr.bf16.mxu0 0
        %539 = vmatpush1.bf16.msra.mxu0 0
        %540 = vmatprep.subr.bf16.mxu0 0
        %541 = vmatpush1.bf16.msra.mxu0 0
        %542 = vmatprep.subr.bf16.mxu0 0
        %543 = vmatpush1.bf16.msra.mxu0 0
        %544 = vmatprep.subr.bf16.mxu0 0
        %545 = vmatpush1.bf16.msra.mxu0 0
        %546 = vmatprep.subr.bf16.mxu0 0
        %547 = vmatpush1.bf16.msra.mxu0 0
        %548 = vmatprep.subr.bf16.mxu0 0
        %549 = vmatpush1.bf16.msra.mxu0 0
        %550 = vmatprep.subr.bf16.mxu0 0
        %551 = vmatpush1.bf16.msra.mxu0 0
        %552 = vmatprep.subr.bf16.mxu0 0
        %553 = vmatpush1.bf16.msra.mxu0 0
        %554 = vmatprep.subr.bf16.mxu0 0
        %555 = vmatpush1.bf16.msra.mxu0 0
        %556 = vmatprep.subr.bf16.mxu0 0
        %557 = vmatpush1.bf16.msra.mxu0 0
        %558 = vmatprep.subr.bf16.mxu0 0
        %559 = vmatpush1.bf16.msra.mxu0 0
        %560 = vmatprep.mubr.bf16.mxu0 0
        %561 = vmatmul.mubr.bf16.gmra.mrb[0].mxu0 %v522
        %v562 = vpop.f32.mrb[0].mxu0
        %v563 = vadd.f32 0.0, %v562
        %v564 = vpop.f32.mrb[0].mxu0
        %v565 = vpop.f32.mrb[0].mxu0
        %v566 = vpop.f32.mrb[0].mxu0
        %567 = vdwg.mxu0
        %568 = vst.msk [vmem:[%s252] sm:$0xff] %vm405, %v563
        %v569 = vld [vmem:[%s391] sm:$0xff]
        %v570 = vpack.c.bf16 %v569, %v569
        %v571 = vld [vmem:[#allocation2] sm:$0xff]
        %v572 = vpack.c.bf16 %v571, %v571
        %574 = vrot.lane.b32.xlu0 %v570, 120
        %v575 = vpop.permute.xlu0 %574
        %577 = vrot.lane.b32.xlu0 %v572, 88
        %v578 = vpop.permute.xlu0 %577
        %v580 = vsel %vm405, %v575, 0
        %v583 = vsel %vm405, %v578, 0
        %585 = vmatprep.subr.bf16.mxu0 0
        %586 = vmatpush1.bf16.xpose.msra.mxu0 %v583
        %587 = vmatprep.subr.bf16.mxu0 0
        %588 = vmatpush1.bf16.xpose.msra.mxu0 0
        %589 = vmatprep.subr.bf16.mxu0 0
        %590 = vmatpush1.bf16.xpose.msra.mxu0 0
        %591 = vmatprep.subr.bf16.mxu0 0
        %592 = vmatpush1.bf16.xpose.msra.mxu0 0
        %593 = vmatprep.subr.bf16.mxu0 0
        %594 = vmatpush1.bf16.xpose.msra.mxu0 0
        %595 = vmatprep.subr.bf16.mxu0 0
        %596 = vmatpush1.bf16.xpose.msra.mxu0 0
        %597 = vmatprep.subr.bf16.mxu0 0
        %598 = vmatpush1.bf16.xpose.msra.mxu0 0
        %599 = vmatprep.subr.bf16.mxu0 0
        %600 = vmatpush1.bf16.xpose.msra.mxu0 0
        %601 = vmatprep.subr.bf16.mxu0 0
        %602 = vmatpush1.bf16.xpose.msra.mxu0 0
        %603 = vmatprep.subr.bf16.mxu0 0
        %604 = vmatpush1.bf16.xpose.msra.mxu0 0
        %605 = vmatprep.subr.bf16.mxu0 0
        %606 = vmatpush1.bf16.xpose.msra.mxu0 0
        %607 = vmatprep.subr.bf16.mxu0 0
        %608 = vmatpush1.bf16.xpose.msra.mxu0 0
        %609 = vmatprep.subr.bf16.mxu0 0
        %610 = vmatpush1.bf16.xpose.msra.mxu0 0
        %611 = vmatprep.subr.bf16.mxu0 0
        %612 = vmatpush1.bf16.xpose.msra.mxu0 0
        %613 = vmatprep.subr.bf16.mxu0 0
        %614 = vmatpush1.bf16.xpose.msra.mxu0 0
        %615 = vmatprep.subr.bf16.mxu0 0
        %616 = vmatpush1.bf16.xpose.msra.mxu0 0
        %617 = vmatprep.mubr.bf16.mxu0 0
        %618 = vmatmul.mubr.bf16.gmra.mrb[0].mxu0 %v580
        %v619 = vpop.f32.mrb[0].mxu0
        %v620 = vadd.f32 %v400, %v619
        %v621 = vpop.f32.mrb[0].mxu0
        %v622 = vpop.f32.mrb[0].mxu0
        %v623 = vpop.f32.mrb[0].mxu0
        %624 = vdwg.mxu0
        %626 = vset.pattern.permute.xlu0 105
        %627 = vperm.xlu0 %626, %v569
        %v628 = vpop.permute.xlu0 %627
        %v630 = vmul.f32 %v628, %v362
        %v631 = vadd.f32 %v620, %v630
        %632 = vset.pattern.permute.xlu0 106
        %633 = vperm.xlu0 %632, %v569
        %v634 = vpop.permute.xlu0 %633
        %v636 = vmul.f32 %v634, %v365
        %v637 = vadd.f32 %v631, %v636
        %638 = vset.pattern.permute.xlu0 107
        %639 = vperm.xlu0 %638, %v569
        %v640 = vpop.permute.xlu0 %639
        %v642 = vmul.f32 %v640, %v368
        %v643 = vadd.f32 %v637, %v642
        %644 = vset.pattern.permute.xlu0 108
        %645 = vperm.xlu0 %644, %v569
        %v646 = vpop.permute.xlu0 %645
        %v648 = vmul.f32 %v646, %v371
        %v649 = vadd.f32 %v643, %v648
        %650 = vset.pattern.permute.xlu0 109
        %651 = vperm.xlu0 %650, %v569
        %v652 = vpop.permute.xlu0 %651
        %v654 = vmul.f32 %v652, %v374
        %v655 = vadd.f32 %v649, %v654
        %656 = vset.pattern.permute.xlu0 110
        %657 = vperm.xlu0 %656, %v569
        %v658 = vpop.permute.xlu0 %657
        %v660 = vmul.f32 %v658, %v377
        %v661 = vadd.f32 %v655, %v660
        %662 = vset.pattern.permute.xlu0 111
        %663 = vperm.xlu0 %662, %v569
        %v664 = vpop.permute.xlu0 %663
        %v666 = vmul.f32 %v664, %v380
        %v667 = vadd.f32 %v661, %v666
        %668 = vset.pattern.permute.xlu0 112
        %669 = vperm.xlu0 %668, %v569
        %v670 = vpop.permute.xlu0 %669
        %v672 = vmul.f32 %v670, %v383
        %v673 = vadd.f32 %v667, %v672
        %674 = vset.pattern.permute.xlu0 113
        %675 = vperm.xlu0 %674, %v569
        %v676 = vpop.permute.xlu0 %675
        %v678 = vmul.f32 %v676, %v386
        %v679 = vadd.f32 %v673, %v678
        %v680 = vsel %vm405, %v679, -inf
        %681 = vmax.xlane.f32.xlu0 %v680
        %v682 = vpop.xlane.xlu0 %681
        %v683 = vsub.f32 %v679, %v682
        %v684 = vmul.f32 %v683, 1.442695
        %v685 = vpow.pop %v684
        %v686 = vsel %vm405, %v685, 0.0
        %687 = vadd.xlane.f32.xlu0 %v686
        %v688 = vpop.xlane.xlu0 %687
        %v689 = vrcp.pop %v688
        %v690 = vmul.f32 %v685, %v689
        %v691 = vpack.c.bf16 %v690, %v690
        %692 = vrot.lane.b32.xlu0 %v572, 56
        %v693 = vpop.permute.xlu0 %692
        %v695 = vsel %vm405, %v691, 0
        %v698 = vsel %vm524, %v693, 0
        %700 = vmatprep.subr.bf16.mxu0 0
        %701 = vmatpush1.bf16.msra.mxu0 %v698
        %702 = vmatprep.subr.bf16.mxu0 0
        %703 = vmatpush1.bf16.msra.mxu0 0
        %704 = vmatprep.subr.bf16.mxu0 0
        %705 = vmatpush1.bf16.msra.mxu0 0
        %706 = vmatprep.subr.bf16.mxu0 0
        %707 = vmatpush1.bf16.msra.mxu0 0
        %708 = vmatprep.subr.bf16.mxu0 0
        %709 = vmatpush1.bf16.msra.mxu0 0
        %710 = vmatprep.subr.bf16.mxu0 0
        %711 = vmatpush1.bf16.msra.mxu0 0
        %712 = vmatprep.subr.bf16.mxu0 0
        %713 = vmatpush1.bf16.msra.mxu0 0
        %714 = vmatprep.subr.bf16.mxu0 0
        %715 = vmatpush1.bf16.msra.mxu0 0
        %716 = vmatprep.subr.bf16.mxu0 0
        %717 = vmatpush1.bf16.msra.mxu0 0
        %718 = vmatprep.subr.bf16.mxu0 0
        %719 = vmatpush1.bf16.msra.mxu0 0
        %720 = vmatprep.subr.bf16.mxu0 0
        %721 = vmatpush1.bf16.msra.mxu0 0
        %722 = vmatprep.subr.bf16.mxu0 0
        %723 = vmatpush1.bf16.msra.mxu0 0
        %724 = vmatprep.subr.bf16.mxu0 0
        %725 = vmatpush1.bf16.msra.mxu0 0
        %726 = vmatprep.subr.bf16.mxu0 0
        %727 = vmatpush1.bf16.msra.mxu0 0
        %728 = vmatprep.subr.bf16.mxu0 0
        %729 = vmatpush1.bf16.msra.mxu0 0
        %730 = vmatprep.subr.bf16.mxu0 0
        %731 = vmatpush1.bf16.msra.mxu0 0
        %732 = vmatprep.mubr.bf16.mxu0 0
        %733 = vmatmul.mubr.bf16.gmra.mrb[0].mxu0 %v695
        %v734 = vpop.f32.mrb[0].mxu0
        %v735 = vadd.f32 0.0, %v734
        %v736 = vpop.f32.mrb[0].mxu0
        %v737 = vpop.f32.mrb[0].mxu0
        %v738 = vpop.f32.mrb[0].mxu0
        %739 = vdwg.mxu0
        %741 = vrot.lane.b32.xlu0 %v735, 8
        %v742 = vpop.permute.xlu0 %741
        %vm744 = vcmask 130112
        %745 = vst.msk [vmem:[%s252] sm:$0xff] %vm744, %v742
        %v746 = vld [vmem:[%s391] sm:$0xff]
        %v747 = vpack.c.bf16 %v746, %v746
        %v748 = vld [vmem:[#allocation2] sm:$0xff]
        %v749 = vpack.c.bf16 %v748, %v748
        %751 = vrot.lane.b32.xlu0 %v747, 112
        %v752 = vpop.permute.xlu0 %751
        %754 = vrot.lane.b32.xlu0 %v749, 80
        %v755 = vpop.permute.xlu0 %754
        %v757 = vsel %vm405, %v752, 0
        %v760 = vsel %vm405, %v755, 0
        %762 = vmatprep.subr.bf16.mxu0 0
        %763 = vmatpush1.bf16.xpose.msra.mxu0 %v760
        %764 = vmatprep.subr.bf16.mxu0 0
        %765 = vmatpush1.bf16.xpose.msra.mxu0 0
        %766 = vmatprep.subr.bf16.mxu0 0
        %767 = vmatpush1.bf16.xpose.msra.mxu0 0
        %768 = vmatprep.subr.bf16.mxu0 0
        %769 = vmatpush1.bf16.xpose.msra.mxu0 0
        %770 = vmatprep.subr.bf16.mxu0 0
        %771 = vmatpush1.bf16.xpose.msra.mxu0 0
        %772 = vmatprep.subr.bf16.mxu0 0
        %773 = vmatpush1.bf16.xpose.msra.mxu0 0
        %774 = vmatprep.subr.bf16.mxu0 0
        %775 = vmatpush1.bf16.xpose.msra.mxu0 0
        %776 = vmatprep.subr.bf16.mxu0 0
        %777 = vmatpush1.bf16.xpose.msra.mxu0 0
        %778 = vmatprep.subr.bf16.mxu0 0
        %779 = vmatpush1.bf16.xpose.msra.mxu0 0
        %780 = vmatprep.subr.bf16.mxu0 0
        %781 = vmatpush1.bf16.xpose.msra.mxu0 0
        %782 = vmatprep.subr.bf16.mxu0 0
        %783 = vmatpush1.bf16.xpose.msra.mxu0 0
        %784 = vmatprep.subr.bf16.mxu0 0
        %785 = vmatpush1.bf16.xpose.msra.mxu0 0
        %786 = vmatprep.subr.bf16.mxu0 0
        %787 = vmatpush1.bf16.xpose.msra.mxu0 0
        %788 = vmatprep.subr.bf16.mxu0 0
        %789 = vmatpush1.bf16.xpose.msra.mxu0 0
        %790 = vmatprep.subr.bf16.mxu0 0
        %791 = vmatpush1.bf16.xpose.msra.mxu0 0
        %792 = vmatprep.subr.bf16.mxu0 0
        %793 = vmatpush1.bf16.xpose.msra.mxu0 0
        %794 = vmatprep.mubr.bf16.mxu0 0
        %795 = vmatmul.mubr.bf16.gmra.mrb[0].mxu0 %v757
        %v796 = vpop.f32.mrb[0].mxu0
        %v797 = vadd.f32 %v400, %v796
        %v798 = vpop.f32.mrb[0].mxu0
        %v799 = vpop.f32.mrb[0].mxu0
        %v800 = vpop.f32.mrb[0].mxu0
        %801 = vdwg.mxu0
        %803 = vset.pattern.permute.xlu0 114
        %804 = vperm.xlu0 %803, %v746
        %v805 = vpop.permute.xlu0 %804
        %v807 = vmul.f32 %v805, %v362
        %v808 = vadd.f32 %v797, %v807
        %809 = vset.pattern.permute.xlu0 115
        %810 = vperm.xlu0 %809, %v746
        %v811 = vpop.permute.xlu0 %810
        %v813 = vmul.f32 %v811, %v365
        %v814 = vadd.f32 %v808, %v813
        %815 = vset.pattern.permute.xlu0 116
        %816 = vperm.xlu0 %815, %v746
        %v817 = vpop.permute.xlu0 %816
        %v819 = vmul.f32 %v817, %v368
        %v820 = vadd.f32 %v814, %v819
        %821 = vset.pattern.permute.xlu0 117
        %822 = vperm.xlu0 %821, %v746
        %v823 = vpop.permute.xlu0 %822
        %v825 = vmul.f32 %v823, %v371
        %v826 = vadd.f32 %v820, %v825
        %827 = vset.pattern.permute.xlu0 118
        %828 = vperm.xlu0 %827, %v746
        %v829 = vpop.permute.xlu0 %828
        %v831 = vmul.f32 %v829, %v374
        %v832 = vadd.f32 %v826, %v831
        %833 = vset.pattern.permute.xlu0 119
        %834 = vperm.xlu0 %833, %v746
        %v835 = vpop.permute.xlu0 %834
        %v837 = vmul.f32 %v835, %v377
        %v838 = vadd.f32 %v832, %v837
        %839 = vset.pattern.permute.xlu0 120
        %840 = vperm.xlu0 %839, %v746
        %v841 = vpop.permute.xlu0 %840
        %v843 = vmul.f32 %v841, %v380
        %v844 = vadd.f32 %v838, %v843
        %845 = vset.pattern.permute.xlu0 121
        %846 = vperm.xlu0 %845, %v746
        %v847 = vpop.permute.xlu0 %846
        %v849 = vmul.f32 %v847, %v383
        %v850 = vadd.f32 %v844, %v849
        %851 = vset.pattern.permute.xlu0 122
        %852 = vperm.xlu0 %851, %v746
        %v853 = vpop.permute.xlu0 %852
        %v855 = vmul.f32 %v853, %v386
        %v856 = vadd.f32 %v850, %v855
        %v857 = vsel %vm405, %v856, -inf
        %858 = vmax.xlane.f32.xlu0 %v857
        %v859 = vpop.xlane.xlu0 %858
        %v860 = vsub.f32 %v856, %v859
        %v861 = vmul.f32 %v860, 1.442695
        %v862 = vpow.pop %v861
        %v863 = vsel %vm405, %v862, 0.0
        %864 = vadd.xlane.f32.xlu0 %v863
        %v865 = vpop.xlane.xlu0 %864
        %v866 = vrcp.pop %v865
        %v867 = vmul.f32 %v862, %v866
        %v868 = vpack.c.bf16 %v867, %v867
        %869 = vrot.lane.b32.xlu0 %v749, 48
        %v870 = vpop.permute.xlu0 %869
        %v872 = vsel %vm405, %v868, 0
        %v875 = vsel %vm524, %v870, 0
        %877 = vmatprep.subr.bf16.mxu0 0
        %878 = vmatpush1.bf16.msra.mxu0 %v875
        %879 = vmatprep.subr.bf16.mxu0 0
        %880 = vmatpush1.bf16.msra.mxu0 0
        %881 = vmatprep.subr.bf16.mxu0 0
        %882 = vmatpush1.bf16.msra.mxu0 0
        %883 = vmatprep.subr.bf16.mxu0 0
        %884 = vmatpush1.bf16.msra.mxu0 0
        %885 = vmatprep.subr.bf16.mxu0 0
        %886 = vmatpush1.bf16.msra.mxu0 0
        %887 = vmatprep.subr.bf16.mxu0 0
        %888 = vmatpush1.bf16.msra.mxu0 0
        %889 = vmatprep.subr.bf16.mxu0 0
        %890 = vmatpush1.bf16.msra.mxu0 0
        %891 = vmatprep.subr.bf16.mxu0 0
        %892 = vmatpush1.bf16.msra.mxu0 0
        %893 = vmatprep.subr.bf16.mxu0 0
        %894 = vmatpush1.bf16.msra.mxu0 0
        %895 = vmatprep.subr.bf16.mxu0 0
        %896 = vmatpush1.bf16.msra.mxu0 0
        %897 = vmatprep.subr.bf16.mxu0 0
        %898 = vmatpush1.bf16.msra.mxu0 0
        %899 = vmatprep.subr.bf16.mxu0 0
        %900 = vmatpush1.bf16.msra.mxu0 0
        %901 = vmatprep.subr.bf16.mxu0 0
        %902 = vmatpush1.bf16.msra.mxu0 0
        %903 = vmatprep.subr.bf16.mxu0 0
        %904 = vmatpush1.bf16.msra.mxu0 0
        %905 = vmatprep.subr.bf16.mxu0 0
        %906 = vmatpush1.bf16.msra.mxu0 0
        %907 = vmatprep.subr.bf16.mxu0 0
        %908 = vmatpush1.bf16.msra.mxu0 0
        %909 = vmatprep.mubr.bf16.mxu0 0
        %910 = vmatmul.mubr.bf16.gmra.mrb[0].mxu0 %v872
        %v911 = vpop.f32.mrb[0].mxu0
        %v912 = vadd.f32 0.0, %v911
        %v913 = vpop.f32.mrb[0].mxu0
        %v914 = vpop.f32.mrb[0].mxu0
        %v915 = vpop.f32.mrb[0].mxu0
        %916 = vdwg.mxu0
        %918 = vrot.lane.b32.xlu0 %v912, 16
        %v919 = vpop.permute.xlu0 %918
        %vm921 = vcmask 195712
        %922 = vst.msk [vmem:[%s252] sm:$0xff] %vm921, %v919
        %v923 = vld [vmem:[%s391] sm:$0xff]
        %v924 = vpack.c.bf16 %v923, %v923
        %v925 = vld [vmem:[#allocation2] sm:$0xff]
        %v926 = vpack.c.bf16 %v925, %v925
        %v927 = vld [vmem:[%s391 + $0x8] sm:$0xff]
        %929 = vrot.lane.b32.xlu0 %v924, 104
        %v930 = vpop.permute.xlu0 %929
        %932 = vrot.lane.b32.xlu0 %v926, 72
        %v933 = vpop.permute.xlu0 %932
        %v935 = vsel %vm405, %v930, 0
        %v938 = vsel %vm405, %v933, 0
        %940 = vmatprep.subr.bf16.mxu0 0
        %941 = vmatpush1.bf16.xpose.msra.mxu0 %v938
        %942 = vmatprep.subr.bf16.mxu0 0
        %943 = vmatpush1.bf16.xpose.msra.mxu0 0
        %944 = vmatprep.subr.bf16.mxu0 0
        %945 = vmatpush1.bf16.xpose.msra.mxu0 0
        %946 = vmatprep.subr.bf16.mxu0 0
        %947 = vmatpush1.bf16.xpose.msra.mxu0 0
        %948 = vmatprep.subr.bf16.mxu0 0
        %949 = vmatpush1.bf16.xpose.msra.mxu0 0
        %950 = vmatprep.subr.bf16.mxu0 0
        %951 = vmatpush1.bf16.xpose.msra.mxu0 0
        %952 = vmatprep.subr.bf16.mxu0 0
        %953 = vmatpush1.bf16.xpose.msra.mxu0 0
        %954 = vmatprep.subr.bf16.mxu0 0
        %955 = vmatpush1.bf16.xpose.msra.mxu0 0
        %956 = vmatprep.subr.bf16.mxu0 0
        %957 = vmatpush1.bf16.xpose.msra.mxu0 0
        %958 = vmatprep.subr.bf16.mxu0 0
        %959 = vmatpush1.bf16.xpose.msra.mxu0 0
        %960 = vmatprep.subr.bf16.mxu0 0
        %961 = vmatpush1.bf16.xpose.msra.mxu0 0
        %962 = vmatprep.subr.bf16.mxu0 0
        %963 = vmatpush1.bf16.xpose.msra.mxu0 0
        %964 = vmatprep.subr.bf16.mxu0 0
        %965 = vmatpush1.bf16.xpose.msra.mxu0 0
        %966 = vmatprep.subr.bf16.mxu0 0
        %967 = vmatpush1.bf16.xpose.msra.mxu0 0
        %968 = vmatprep.subr.bf16.mxu0 0
        %969 = vmatpush1.bf16.xpose.msra.mxu0 0
        %970 = vmatprep.subr.bf16.mxu0 0
        %971 = vmatpush1.bf16.xpose.msra.mxu0 0
        %972 = vmatprep.mubr.bf16.mxu0 0
        %973 = vmatmul.mubr.bf16.gmra.mrb[0].mxu0 %v935
        %v974 = vpop.f32.mrb[0].mxu0
        %v975 = vadd.f32 %v400, %v974
        %v976 = vpop.f32.mrb[0].mxu0
        %v977 = vpop.f32.mrb[0].mxu0
        %v978 = vpop.f32.mrb[0].mxu0
        %979 = vdwg.mxu0
        %981 = vset.pattern.permute.xlu0 123
        %982 = vperm.xlu0 %981, %v923
        %v983 = vpop.permute.xlu0 %982
        %v985 = vmul.f32 %v983, %v362
        %v986 = vadd.f32 %v975, %v985
        %987 = vset.pattern.permute.xlu0 124
        %988 = vperm.xlu0 %987, %v923
        %v989 = vpop.permute.xlu0 %988
        %v991 = vmul.f32 %v989, %v365
        %v992 = vadd.f32 %v986, %v991
        %993 = vset.pattern.permute.xlu0 125
        %994 = vperm.xlu0 %993, %v923
        %v995 = vpop.permute.xlu0 %994
        %v997 = vmul.f32 %v995, %v368
        %v998 = vadd.f32 %v992, %v997
        %999 = vset.pattern.permute.xlu0 126
        %1000 = vperm.xlu0 %999, %v923
        %v1001 = vpop.permute.xlu0 %1000
        %v1003 = vmul.f32 %v1001, %v371
        %v1004 = vadd.f32 %v998, %v1003
        %1005 = vset.pattern.permute.xlu0 127
        %1006 = vperm.xlu0 %1005, %v923
        %v1007 = vpop.permute.xlu0 %1006
        %v1009 = vmul.f32 %v1007, %v374
        %v1010 = vadd.f32 %v1004, %v1009
        %1012 = vset.pattern.permute.xlu0 0
        %1013 = vperm.xlu0 %1012, %v927
        %v1014 = vpop.permute.xlu0 %1013
        %v1016 = vmul.f32 %v1014, %v377
        %v1017 = vadd.f32 %v1010, %v1016
        %1018 = vset.pattern.permute.xlu0 1
        %1019 = vperm.xlu0 %1018, %v927
        %v1020 = vpop.permute.xlu0 %1019
        %v1022 = vmul.f32 %v1020, %v380
        %v1023 = vadd.f32 %v1017, %v1022
        %1024 = vset.pattern.permute.xlu0 2
        %1025 = vperm.xlu0 %1024, %v927
        %v1026 = vpop.permute.xlu0 %1025
        %v1028 = vmul.f32 %v1026, %v383
        %v1029 = vadd.f32 %v1023, %v1028
        %1030 = vset.pattern.permute.xlu0 3
        %1031 = vperm.xlu0 %1030, %v927
        %v1032 = vpop.permute.xlu0 %1031
        %v1034 = vmul.f32 %v1032, %v386
        %v1035 = vadd.f32 %v1029, %v1034
        %v1036 = vsel %vm405, %v1035, -inf
        %1037 = vmax.xlane.f32.xlu0 %v1036
        %v1038 = vpop.xlane.xlu0 %1037
        %v1039 = vsub.f32 %v1035, %v1038
        %v1040 = vmul.f32 %v1039, 1.442695
        %v1041 = vpow.pop %v1040
        %v1042 = vsel %vm405, %v1041, 0.0
        %1043 = vadd.xlane.f32.xlu0 %v1042
        %v1044 = vpop.xlane.xlu0 %1043
        %v1045 = vrcp.pop %v1044
        %v1046 = vmul.f32 %v1041, %v1045
        %v1047 = vpack.c.bf16 %v1046, %v1046
        %1048 = vrot.lane.b32.xlu0 %v926, 40
        %v1049 = vpop.permute.xlu0 %1048
        %v1051 = vsel %vm405, %v1047, 0
        %v1054 = vsel %vm524, %v1049, 0
        %1056 = vmatprep.subr.bf16.mxu0 0
        %1057 = vmatpush1.bf16.msra.mxu0 %v1054
        %1058 = vmatprep.subr.bf16.mxu0 0
        %1059 = vmatpush1.bf16.msra.mxu0 0
        %1060 = vmatprep.subr.bf16.mxu0 0
        %1061 = vmatpush1.bf16.msra.mxu0 0
        %1062 = vmatprep.subr.bf16.mxu0 0
        %1063 = vmatpush1.bf16.msra.mxu0 0
        %1064 = vmatprep.subr.bf16.mxu0 0
        %1065 = vmatpush1.bf16.msra.mxu0 0
        %1066 = vmatprep.subr.bf16.mxu0 0
        %1067 = vmatpush1.bf16.msra.mxu0 0
        %1068 = vmatprep.subr.bf16.mxu0 0
        %1069 = vmatpush1.bf16.msra.mxu0 0
        %1070 = vmatprep.subr.bf16.mxu0 0
        %1071 = vmatpush1.bf16.msra.mxu0 0
        %1072 = vmatprep.subr.bf16.mxu0 0
        %1073 = vmatpush1.bf16.msra.mxu0 0
        %1074 = vmatprep.subr.bf16.mxu0 0
        %1075 = vmatpush1.bf16.msra.mxu0 0
        %1076 = vmatprep.subr.bf16.mxu0 0
        %1077 = vmatpush1.bf16.msra.mxu0 0
        %1078 = vmatprep.subr.bf16.mxu0 0
        %1079 = vmatpush1.bf16.msra.mxu0 0
        %1080 = vmatprep.subr.bf16.mxu0 0
        %1081 = vmatpush1.bf16.msra.mxu0 0
        %1082 = vmatprep.subr.bf16.mxu0 0
        %1083 = vmatpush1.bf16.msra.mxu0 0
        %1084 = vmatprep.subr.bf16.mxu0 0
        %1085 = vmatpush1.bf16.msra.mxu0 0
        %1086 = vmatprep.subr.bf16.mxu0 0
        %1087 = vmatpush1.bf16.msra.mxu0 0
        %1088 = vmatprep.mubr.bf16.mxu0 0
        %1089 = vmatmul.mubr.bf16.gmra.mrb[0].mxu0 %v1051
        %v1090 = vpop.f32.mrb[0].mxu0
        %v1091 = vadd.f32 0.0, %v1090
        %v1092 = vpop.f32.mrb[0].mxu0
        %v1093 = vpop.f32.mrb[0].mxu0
        %v1094 = vpop.f32.mrb[0].mxu0
        %1095 = vdwg.mxu0
        %1097 = vrot.lane.b32.xlu0 %v1091, 24
        %v1098 = vpop.permute.xlu0 %1097
        %vm1100 = vcmask 261312
        %1101 = vst.msk [vmem:[%s252] sm:$0xff] %vm1100, %v1098
        %s1102 = sand.u32 %s138, 1
        %s1103 = scalar_lea.sflag [#allocation5], %s1102
        %s1104 = sand.u32 %s138, 1
        %s1105 = smul.addr %s1104, 8
        %s1106 = scalar_lea.vmem [#allocation8], %s1105
        // Predicated region
        $region49: #{tpu_custom_call.1} parent=35 // pred_check
          %p1107 = pneg %p148
        $region50: #{tpu_custom_call.1} parent=35 // pred_check_branch
          %1109 = sbr.rel (%p1107) target = $region52
        $region51: #{tpu_custom_call.1} parent=35 // pred_region
          %s1111 = ssub.s32 128, 128
          %1112 = vsyncadd %s1103, %s1111
          %s1113 = sadd.s32 %s27, %s26
          %s1114 = smul.addr %s1113, 128
          %s1115 = scalar_lea.hbm %s4, %s1114
          %s1117 = sshll.u32 %s1106, 4
          %s1118 = int_to_ptr.vmem [resolvable:$true] %s1117
          %1120 = dma.vmem_to_hbm [thread:$0]  %s1118, 128, %s1115, %s1103
        $region52: #{tpu_custom_call.1} parent=35 // pred_fallthru
          _
      $region36: #{tpu_custom_call.1} parent=5 // pred_fallthru
        _
      %p1121 = scmp.le.s32.totalorder 2, %s17
      // Predicated region
      $region53: #{tpu_custom_call.1} parent=5 // pred_check
        %p1122 = pneg %p1121
      $region54: #{tpu_custom_call.1} parent=5 // pred_check_branch
        %1124 = sbr.rel (%p1122) target = $region56
      $region55: #{tpu_custom_call.1} parent=5 // pred_region
        %s1125 = ssub.s32 %s17, 2
        // Predicated region
        $region57: #{tpu_custom_call.1} parent=55 // pred_check
          %p1126 = pneg %p154
        $region58: #{tpu_custom_call.1} parent=55 // pred_check_branch
          %1128 = sbr.rel (%p1126) target = $region60
        $region59: #{tpu_custom_call.1} parent=55 // pred_region
          %s1129 = sand.u32 %s139, 1
          %s1130 = scalar_lea.sflag [#allocation5], %s1129
          %s1131 = sand.u32 %s139, 1
          %s1132 = smul.addr %s1131, 8
          %s1133 = scalar_lea.vmem [#allocation8], %s1132
          %1134 = dma.done %s1130, 128
        $region60: #{tpu_custom_call.1} parent=55 // pred_fallthru
          _
      $region56: #{tpu_custom_call.1} parent=5 // pred_fallthru
        _
    $region6: #{tpu_custom_call.1} parent=1 // loop_footer
      %s21 = sadd.s32 1, %s17
    $region7: #{tpu_custom_call.1} parent=1 // loop_footer_branch
      %16 = sbr.rel target = $region3
    $region8: #{tpu_custom_call.1} parent=1 // loop_exit
      _
    %1135 = vsyncpa [#allocation4], 1
    %s1136 = scalar_lea.sflag [#allocation4], 1
    %1137 = vsyncpa %s1136, 1
    %1138 = vsyncpa [#allocation7], 1
    %1139 = vsyncpa [#allocation5], 1
    %s1140 = scalar_lea.sflag [#allocation5], 1
    %1141 = vsyncpa %s1140, 1

</llo_original>
